<compile_context>
chip_gen: v7x
topology: tpu7x:2x2x1
jax: 0.10.0
libtpu: 0.0.40
codegen_flags: <defaults>
</compile_context>

<pallas_src>
import jax
import jax.numpy as jnp
from jax.experimental import pallas as pl
from jax.experimental.pallas import tpu as pltpu


_LANE = 128                       # lane width / required block-extent multiple
_BLOCK_BYTES_TARGET = 2 << 20     # ~2 MiB per block, independent of dtype
_SMALL_BYTES = 1 << 20            # below this, let XLA fuse the copy instead


def _round_down_lane(n):
    return (n // _LANE) * _LANE


def _round_up_lane(n):
    return -(-n // _LANE) * _LANE


def _pick_tiles(T, C, itemsize):
    """Byte-based, dtype-aware tile selection (~_BLOCK_BYTES_TARGET per block).

    Legal extents are multiples of 128 or the full dimension.  Prefers a
    full-extent C block so every input DMA is one contiguous HBM slab; only
    tiles C when C alone (x 128 rows of T) exceeds the byte budget.
    """
    budget = max(_BLOCK_BYTES_TARGET // itemsize, _LANE * _LANE)  # elems/block
    if C * _LANE <= budget:
        tC = C                                   # full-C contiguous input slab
        tT = budget // max(C, 1)                 # >= 128 by the branch guard
        tT = T if tT >= T else max(_round_down_lane(tT), _LANE)
    else:
        # C is huge: tile it too.  tC < C is guaranteed here (else the
        # full-C branch would have been taken).
        tC = max(_round_down_lane(budget // _LANE), _LANE)
        tT = min(_LANE, T)
    return tT, tC


def _transpose_tile_kernel(x_ref, o_ref):
    # Batch dim is Squeezed away: x_ref is (tT, tC), o_ref is (tC, tT).
    # Plain 2-D transpose -> XLU vxpose on-chip; at these block sizes the
    # kernel stays DMA-bound, so no stripe-wise splitting is needed.
    o_ref[...] = x_ref[...].T


def transpose_pallas(x, dims=(1, 2), contiguous=True):
    """Pallas equivalent of Transpose(*dims, contiguous=...).

    The Mamba hot path (3-D input, swap dims (1, 2), large activations) runs
    through a tiled Pallas kernel; other dims/ranks and tiny inputs fall back
    to jnp.swapaxes (which XLA fuses into neighbors).
    """
    # TODO(synk): contiguous=False (an aliasing view) has no Pallas equivalent;
    # we always materialize a contiguous, semantically-equal result.
    del contiguous

    d = tuple(sorted(dd % x.ndim for dd in dims))
    if x.ndim != 3 or d != (1, 2):
        return jnp.swapaxes(x, dims[0], dims[1])

    B, T, C = x.shape
    itemsize = jnp.dtype(x.dtype).itemsize
    total_bytes = B * T * C * itemsize

    if total_bytes < _SMALL_BYTES:
        # Tiny activations (e.g. the 2x8x32 benchmark shape): launch + per-step
        # overhead dominates, a standalone kernel cannot beat a fused XLA copy.
        # TODO(synk): at these sizes the transpose should be fused into the
        # neighboring Mamba matmul/conv BlockSpec index_map instead.
        return jnp.swapaxes(x, 1, 2)

    tT, tC = _pick_tiles(T, C, itemsize)

    # v7x megacore: with B == 1 and a single C block, split C so both
    # TensorCores get work on the "parallel" axes (near-zero cost on v5e/v6e).
    if B == 1 and tC == C and pl.cdiv(T, tT) >= 2 and C >= 2 * _LANE:
        half = _round_up_lane(pl.cdiv(C, 2))
        if half < C:
            tC = half

    nT = pl.cdiv(T, tT)   # cdiv grids: ragged dims get masked edge tiles
    nC = pl.cdiv(C, tC)
    block_bytes = tT * tC * itemsize

    # 2 arrays x 2 pipeline buffers x block + headroom; floor at 16 MiB so the
    # limit is explicit and safe on all of v5e / v6e / v7x.
    vmem_limit = int(max(16 << 20, 4 * block_bytes + (4 << 20)))

    # Grid order (B, C_tiles, T_tiles): the T-tile index walks the output's
    # contiguous last axis innermost -> sequential HBM writeback per core.
    return pl.pallas_call(
        _transpose_tile_kernel,
        out_shape=jax.ShapeDtypeStruct((B, C, T), x.dtype),
        grid_spec=pltpu.PrefetchScalarGridSpec(
            num_scalar_prefetch=0,
            grid=(B, nC, nT),
            in_specs=[
                pl.BlockSpec((pl.Squeezed(), tT, tC),
                             lambda b, j, i: (b, i, j)),
            ],
            out_specs=pl.BlockSpec((pl.Squeezed(), tC, tT),
                                   lambda b, j, i: (b, j, i)),
        ),
        compiler_params=pltpu.CompilerParams(
            dimension_semantics=("parallel", "parallel", "arbitrary"),
            vmem_limit_bytes=vmem_limit),
        cost_estimate=pl.CostEstimate(
            flops=0, transcendentals=0, bytes_accessed=2 * total_bytes),
    )(x)


if __name__ == "__main__":
    key = jax.random.PRNGKey(0)
    k1, k2, k3, k4 = jax.random.split(key, 4)

    # 1) Mamba-benchmark-like small activation (batch, seq_len, channels):
    #    takes the small-input fallback (standalone kernel would be overhead).
    x = jax.random.normal(k1, (2, 8, 32), dtype=jnp.float32)
    y = jax.block_until_ready(transpose_pallas(x, dims=(1, 2), contiguous=True))
    assert y.shape == (2, 32, 8)
    assert y.dtype == x.dtype
    assert bool(jnp.array_equal(y, jnp.swapaxes(x, 1, 2)))

    # 2) Pallas path: full-extent, 2 MiB, (8,128)-aligned block per batch elem.
    x2 = jax.random.normal(k2, (2, 1024, 512), dtype=jnp.float32)
    y2 = jax.block_until_ready(transpose_pallas(x2))
    assert y2.shape == (2, 512, 1024)
    assert bool(jnp.array_equal(y2, jnp.swapaxes(x2, 1, 2)))

    # 3) Pallas path: ragged T (masked edge tile via cdiv grid) + B==1 C split.
    x3 = jax.random.normal(k3, (1, 1100, 512), dtype=jnp.float32)
    y3 = jax.block_until_ready(transpose_pallas(x3))
    assert y3.shape == (1, 512, 1100)
    assert bool(jnp.array_equal(y3, jnp.swapaxes(x3, 1, 2)))

    # 4) dtype-aware (bf16) path: same byte budget -> larger element tiles.
    x4 = jax.random.normal(k4, (2, 1024, 512), dtype=jnp.bfloat16)
    y4 = jax.block_until_ready(transpose_pallas(x4))
    assert y4.shape == (2, 512, 1024)
    assert y4.dtype == x4.dtype
    assert bool(jnp.array_equal(y4, jnp.swapaxes(x4, 1, 2)))

    print("KERNEL_OK")
</pallas_src>

<mosaic_0001>
module attributes {stable_mosaic.version = 11 : i64} {
  func.func @_transpose_tile_kernel(%arg0: i32, %arg1: i32, %arg2: i32, %arg3: memref<1x1024x512xf32, #tpu.memory_space<vmem>>, %arg4: memref<1x512x1024xf32, #tpu.memory_space<vmem>>) attributes {dimension_semantics = [#tpu.dimension_semantics<parallel>, #tpu.dimension_semantics<parallel>, #tpu.dimension_semantics<arbitrary>], iteration_bounds = array<i64: 2, 1, 1>, scalar_prefetch = 0 : i64, scratch_operands = 0 : i64, tpu.core_type = #tpu.core_type<tc>, window_params = [{transform_indices = @transform_0, window_bounds = array<i64: 1, 1024, 512>}, {transform_indices = @transform_1, window_bounds = array<i64: 1, 512, 1024>}]} {
    %c0 = arith.constant 0 : index
    %c0_0 = arith.constant 0 : index
    %c0_1 = arith.constant 0 : index
    %0 = vector.load %arg3[%c0, %c0_0, %c0_1] : memref<1x1024x512xf32, #tpu.memory_space<vmem>>, vector<1x1024x512xf32>
    %1 = vector.shape_cast %0 : vector<1x1024x512xf32> to vector<1024x512xf32>
    %2 = tpu.transpose %1, [1, 0] : vector<1024x512xf32> -> vector<512x1024xf32>
    %c0_2 = arith.constant 0 : index
    %c0_3 = arith.constant 0 : index
    %c0_4 = arith.constant 0 : index
    %3 = vector.load %arg4[%c0_2, %c0_3, %c0_4] : memref<1x512x1024xf32, #tpu.memory_space<vmem>>, vector<1x512x1024xf32>
    %4 = vector.shape_cast %3 : vector<1x512x1024xf32> to vector<512x1024xf32>
    %5 = vector.shape_cast %2 : vector<512x1024xf32> to vector<1x512x1024xf32>
    tpu.vector_store %arg4[%c0_2, %c0_3, %c0_4], %5 {strides = array<i32>} : memref<1x512x1024xf32, #tpu.memory_space<vmem>>, vector<1x512x1024xf32>,
    return
  }
  func.func @transform_0(%arg0: i32, %arg1: i32, %arg2: i32) -> (i32, i32, i32) {
    %c0_i32 = arith.constant 0 : i32
    return %arg0, %arg2, %arg1 : i32, i32, i32
  }
  func.func @transform_1(%arg0: i32, %arg1: i32, %arg2: i32) -> (i32, i32, i32) {
    %c0_i32 = arith.constant 0 : i32
    return %arg0, %arg1, %arg2 : i32, i32, i32
  }
}

</mosaic_0001>

<llo_original>
// kernel: tpu_custom_call.1
$region0: #{tpu_custom_call.1}
  #allocation0 [shape = 'u32[]', space=smem, size = 0x4, offset = 0x4, fixed_abs, tag = 'smem constant byte address 0x4 - core index']
  #allocation1 [shape = 'u32[144,128]{1,0:T(1,128)}', space=vmem, size = 0x12000, scoped, tag = 'internal scratch']
  %s0 = inlined_call_operand.hbm [shape: f32[2,1024,512], index: 0, kind: input, shape index: {}]
  %s1 = inlined_call_operand.hbm [shape: f32[2,512,1024], index: 1, kind: output, shape index: {}]
  %s2 = sld [smem:[#allocation0]]
  $region41: #{tpu_custom_call.1} parent=0
    _
  %s4 = ssub.s32 1, %s2
  %s5 = scalar_select 0, %s4, %s2
  $region1: #{tpu_custom_call.1} parent=0
    #allocation2 [shape = 'u8[4194304]{0}', space=vmem, size = 0x400000, scoped, tag = 'input window, operand 0']
    #allocation3 [shape = 's32[2]{0}', space=sflag, size = 0x8, scoped, tag = 'scoped memory for tpu_custom_call.1']
    #allocation4 [shape = 's32[2]{0}', space=sflag, size = 0x8, scoped, tag = 'scoped memory for tpu_custom_call.1']
    #allocation5 [shape = 'u8[4194304]{0}', space=vmem, size = 0x400000, scoped, tag = 'output window, operand 0']
    %6 = vsyncpa [#allocation3], 0
    %s7 = scalar_lea.sflag [#allocation3], 1
    %8 = vsyncpa %s7, 0
    %9 = vsyncpa [#allocation4], 0
    %s10 = scalar_lea.sflag [#allocation4], 1
    %11 = vsyncpa %s10, 0
    loop: start=0, step=1, limit=4
    $region2: #{tpu_custom_call.1} parent=1 // loop_pre_header
      _
    $region3: #{tpu_custom_call.1} parent=1 // loop_header
      %s13 = sphi 0, %s17
      %p14 = scmp.ge.s32.totalorder %s13, 4
      %s20 = sphi 0, %s39
      %s21 = sphi 0, %s35
      %s22 = sphi 0, %s31
      %s23 = sphi 0, %s20
      %s24 = sphi 0, %s21
      %s25 = sphi 0, %s22
      %s26 = sphi 0, %s23
      %s27 = sphi 0, %s24
      %s28 = sphi 0, %s25
      %s46 = sphi 0, %s48
      %s49 = sphi 0, %s46
      %s50 = sphi 0, %s49
      %s66 = sphi 0, %s50
      %s76 = sphi 0, %s78
      %s79 = sphi 0, %s76
      %s80 = sphi 0, %s79
      %s96 = sphi 0, %s80
    $region4: #{tpu_custom_call.1} parent=1 // loop_header_branch
      %16 = sbr.rel (%p14) target = $region8
    $region5: #{tpu_custom_call.1} parent=1 // loop_body
      %s18 = ssub.s32 %s13, 1
      %s19 = ssub.s32 %s13, 2
      %s29 = sadd.s32 1, %s22
      %p30 = scmp.ge.s32.totalorder %s29, 1
      %s31 = scalar_select %p30, 0, %s29
      %s32 = sadd.s32 1, %s21
      %s33 = scalar_select %p30, %s32, %s21
      %p34 = scmp.ge.s32.totalorder %s33, 1
      %s35 = scalar_select %p34, 0, %s33
      %s36 = sadd.s32 1, %s20
      %s37 = scalar_select %p34, %s36, %s20
      %p38 = scmp.ge.s32.totalorder %s37, 2
      %s39 = scalar_select %p38, 0, %s37
      %s40 = ssub.s32 %s20, %s39
      %s41 = ssub.s32 %s22, %s31
      %s42 = sor.u32 %s40, %s41
      %s43 = ssub.s32 %s21, %s35
      %s44 = sor.u32 %s42, %s43
      %p45 = scmp.eq.s32.totalorder %s44, 0
      %s47 = sadd.s32 %s46, 1
      %s48 = scalar_select %p45, %s46, %s47
      %p51 = pneg %p45
      %p52 = scmp.eq.s32.totalorder %s13, 1
      %p53 = por %p51, %p52
      %p54 = scmp.ne.s32.totalorder %s46, %s49
      %p55 = scmp.eq.s32.totalorder %s13, 0
      %p56 = por %p54, %p55
      %p57 = scmp.ne.s32.totalorder %s46, %s49
      %p58 = scmp.eq.s32.totalorder %s18, 1
      %p59 = por %p57, %p58
      %p60 = scmp.ne.s32.totalorder %s49, %s50
      %p61 = scmp.eq.s32.totalorder %s18, 0
      %p62 = por %p60, %p61
      %p63 = scmp.ne.s32.totalorder %s49, %s50
      %p64 = scmp.eq.s32.totalorder %s19, 1
      %p65 = por %p63, %p64
      %p67 = scmp.ne.s32.totalorder %s50, %s66
      %p68 = scmp.eq.s32.totalorder %s19, 0
      %p69 = por %p67, %p68
      %s70 = ssub.s32 %s20, %s39
      %s71 = ssub.s32 %s21, %s35
      %s72 = sor.u32 %s70, %s71
      %s73 = ssub.s32 %s22, %s31
      %s74 = sor.u32 %s72, %s73
      %p75 = scmp.eq.s32.totalorder %s74, 0
      %s77 = sadd.s32 %s76, 1
      %s78 = scalar_select %p75, %s76, %s77
      %p81 = pneg %p75
      %p82 = scmp.eq.s32.totalorder %s13, 1
      %p83 = por %p81, %p82
      %p84 = scmp.ne.s32.totalorder %s76, %s79
      %p85 = scmp.eq.s32.totalorder %s13, 0
      %p86 = por %p84, %p85
      %p87 = scmp.ne.s32.totalorder %s76, %s79
      %p88 = scmp.eq.s32.totalorder %s18, 1
      %p89 = por %p87, %p88
      %p90 = scmp.ne.s32.totalorder %s79, %s80
      %p91 = scmp.eq.s32.totalorder %s18, 0
      %p92 = por %p90, %p91
      %p93 = scmp.ne.s32.totalorder %s79, %s80
      %p94 = scmp.eq.s32.totalorder %s19, 1
      %p95 = por %p93, %p94
      %p97 = scmp.ne.s32.totalorder %s80, %s96
      %p98 = scmp.eq.s32.totalorder %s19, 0
      %p99 = por %p97, %p98
      %p100 = scmp.le.s32.totalorder 1, %s13
      %p101 = scmp.lt.s32.totalorder %s13, 3
      %p102 = pnand %p100, %p101
      %p103 = pneg %p102
      // Predicated region
      $region9: #{tpu_custom_call.1} parent=5 // pred_check
        _
      $region10: #{tpu_custom_call.1} parent=5 // pred_check_branch
        %105 = sbr.rel (%p102) target = $region12
      $region11: #{tpu_custom_call.1} parent=5 // pred_region
        %s106 = ssub.s32 %s13, 1
      $region12: #{tpu_custom_call.1} parent=5 // pred_fallthru
        _
      %p107 = scmp.lt.s32.totalorder %s13, 2
      // Predicated region
      $region13: #{tpu_custom_call.1} parent=5 // pred_check
        %p108 = pneg %p107
      $region14: #{tpu_custom_call.1} parent=5 // pred_check_branch
        %110 = sbr.rel (%p108) target = $region16
      $region15: #{tpu_custom_call.1} parent=5 // pred_region
        // Predicated region
        $region17: #{tpu_custom_call.1} parent=15 // pred_check
          %p111 = pneg %p56
        $region18: #{tpu_custom_call.1} parent=15 // pred_check_branch
          %113 = sbr.rel (%p111) target = $region20
        $region19: #{tpu_custom_call.1} parent=15 // pred_region
          %s114 = sand.u32 %s46, 1
          %s115 = scalar_lea.sflag [#allocation3], %s114
          %s116 = sand.u32 %s46, 1
          %s117 = smul.addr %s116, 4096
          %s118 = scalar_lea.vmem [#allocation2], %s117
          %s119 = smul.u32 128, %s22
          %s120 = smul.u32 4, %s21
          %s122 = ssub.s32 65536, 65536
          %123 = vsyncadd %s115, %s122
          %s124 = smul.addr %s119, 4
          %s125 = sadd.s32 %s120, %s124
          %s126 = smul.addr %s20, 512
          %s127 = sadd.s32 %s125, %s126
          %s128 = smul.addr %s127, 128
          %s129 = scalar_lea.hbm %s0, %s128
          %s130 = sshll.u32 %s118, 4
          %s131 = int_to_ptr.vmem [resolvable:$true] %s130
          %136 = dma.hbm_to_vmem [thread:$0]  %s129, 65536, %s131, %s115, 512, 512, 32
        $region20: #{tpu_custom_call.1} parent=15 // pred_fallthru
          _
      $region16: #{tpu_custom_call.1} parent=5 // pred_fallthru
        _
      %p137 = scmp.le.s32.totalorder 1, %s13
      %p138 = scmp.lt.s32.totalorder %s13, 3
      %p139 = pnand %p137, %p138
      %p140 = pneg %p139
      // Predicated region
      $region21: #{tpu_custom_call.1} parent=5 // pred_check
        _
      $region22: #{tpu_custom_call.1} parent=5 // pred_check_branch
        %142 = sbr.rel (%p139) target = $region24
      $region23: #{tpu_custom_call.1} parent=5 // pred_region
        %s143 = ssub.s32 %s13, 1
        %s144 = sand.u32 %s49, 1
        %s145 = scalar_lea.sflag [#allocation3], %s144
        %s146 = sand.u32 %s49, 1
        %s147 = smul.addr %s146, 4096
        %s148 = scalar_lea.vmem [#allocation2], %s147
        // Predicated region
        $region25: #{tpu_custom_call.1} parent=23 // pred_check
          %p149 = pneg %p62
        $region26: #{tpu_custom_call.1} parent=23 // pred_check_branch
          %151 = sbr.rel (%p149) target = $region28
        $region27: #{tpu_custom_call.1} parent=23 // pred_region
          %152 = dma.done %s145, 65536
        $region28: #{tpu_custom_call.1} parent=23 // pred_fallthru
          _
        %s153 = sand.u32 %s49, 1
        %s154 = scalar_lea.sflag [#allocation3], %s153
        %s155 = sand.u32 %s49, 1
        %s156 = smul.addr %s155, 4096
        %s157 = scalar_lea.vmem [#allocation2], %s156
        %p158 = pneg %p62
        %p159 = pneg %p59
        %p160 = pneg %p92
        %p161 = pneg %p89
        %s162 = sand.u32 %s79, 1
        %s163 = scalar_lea.sflag [#allocation4], %s162
        %s164 = sand.u32 %s79, 1
        %s165 = smul.addr %s164, 4096
        %s166 = scalar_lea.vmem [#allocation5], %s165
        %s167 = smul.u32 128, %s25
        %s168 = smul.u32 4, %s24
        %s169 = smul.u32 64, %s24
        %s170 = smul.u32 8, %s25
        %v171 = vld [vmem:[%s148] sm:$0xff]
        %v172 = vld [vmem:[%s148 + $0x8] sm:$0xff]
        %v173 = vld [vmem:[%s148 + $0x10] sm:$0xff]
        %v174 = vld [vmem:[%s148 + $0x18] sm:$0xff]
        %v175 = vld [vmem:[%s148 + $0x20] sm:$0xff]
        %v176 = vld [vmem:[%s148 + $0x28] sm:$0xff]
        %v177 = vld [vmem:[%s148 + $0x30] sm:$0xff]
        %v178 = vld [vmem:[%s148 + $0x38] sm:$0xff]
        %v179 = vld [vmem:[%s148 + $0x40] sm:$0xff]
        %v180 = vld [vmem:[%s148 + $0x48] sm:$0xff]
        %v181 = vld [vmem:[%s148 + $0x50] sm:$0xff]
        %v182 = vld [vmem:[%s148 + $0x58] sm:$0xff]
        %v183 = vld [vmem:[%s148 + $0x60] sm:$0xff]
        %v184 = vld [vmem:[%s148 + $0x68] sm:$0xff]
        %v185 = vld [vmem:[%s148 + $0x70] sm:$0xff]
        %v186 = vld [vmem:[%s148 + $0x78] sm:$0xff]
        %v187 = vld [vmem:[%s148 + $0x80] sm:$0xff]
        %v188 = vld [vmem:[%s148 + $0x88] sm:$0xff]
        %v189 = vld [vmem:[%s148 + $0x90] sm:$0xff]
        %v190 = vld [vmem:[%s148 + $0x98] sm:$0xff]
        %v191 = vld [vmem:[%s148 + $0xa0] sm:$0xff]
        %v192 = vld [vmem:[%s148 + $0xa8] sm:$0xff]
        %v193 = vld [vmem:[%s148 + $0xb0] sm:$0xff]
        %v194 = vld [vmem:[%s148 + $0xb8] sm:$0xff]
        %v195 = vld [vmem:[%s148 + $0xc0] sm:$0xff]
        %v196 = vld [vmem:[%s148 + $0xc8] sm:$0xff]
        %v197 = vld [vmem:[%s148 + $0xd0] sm:$0xff]
        %v198 = vld [vmem:[%s148 + $0xd8] sm:$0xff]
        %v199 = vld [vmem:[%s148 + $0xe0] sm:$0xff]
        %v200 = vld [vmem:[%s148 + $0xe8] sm:$0xff]
        %v201 = vld [vmem:[%s148 + $0xf0] sm:$0xff]
        %v202 = vld [vmem:[%s148 + $0xf8] sm:$0xff]
        %v203 = vld [vmem:[%s148 + $0x100] sm:$0xff]
        %v204 = vld [vmem:[%s148 + $0x108] sm:$0xff]
        %v205 = vld [vmem:[%s148 + $0x110] sm:$0xff]
        %v206 = vld [vmem:[%s148 + $0x118] sm:$0xff]
        %v207 = vld [vmem:[%s148 + $0x120] sm:$0xff]
        %v208 = vld [vmem:[%s148 + $0x128] sm:$0xff]
        %v209 = vld [vmem:[%s148 + $0x130] sm:$0xff]
        %v210 = vld [vmem:[%s148 + $0x138] sm:$0xff]
        %v211 = vld [vmem:[%s148 + $0x140] sm:$0xff]
        %v212 = vld [vmem:[%s148 + $0x148] sm:$0xff]
        %v213 = vld [vmem:[%s148 + $0x150] sm:$0xff]
        %v214 = vld [vmem:[%s148 + $0x158] sm:$0xff]
        %v215 = vld [vmem:[%s148 + $0x160] sm:$0xff]
        %v216 = vld [vmem:[%s148 + $0x168] sm:$0xff]
        %v217 = vld [vmem:[%s148 + $0x170] sm:$0xff]
        %v218 = vld [vmem:[%s148 + $0x178] sm:$0xff]
        %v219 = vld [vmem:[%s148 + $0x180] sm:$0xff]
        %v220 = vld [vmem:[%s148 + $0x188] sm:$0xff]
        %v221 = vld [vmem:[%s148 + $0x190] sm:$0xff]
        %v222 = vld [vmem:[%s148 + $0x198] sm:$0xff]
        %v223 = vld [vmem:[%s148 + $0x1a0] sm:$0xff]
        %v224 = vld [vmem:[%s148 + $0x1a8] sm:$0xff]
        %v225 = vld [vmem:[%s148 + $0x1b0] sm:$0xff]
        %v226 = vld [vmem:[%s148 + $0x1b8] sm:$0xff]
        %v227 = vld [vmem:[%s148 + $0x1c0] sm:$0xff]
        %v228 = vld [vmem:[%s148 + $0x1c8] sm:$0xff]
        %v229 = vld [vmem:[%s148 + $0x1d0] sm:$0xff]
        %v230 = vld [vmem:[%s148 + $0x1d8] sm:$0xff]
        %v231 = vld [vmem:[%s148 + $0x1e0] sm:$0xff]
        %v232 = vld [vmem:[%s148 + $0x1e8] sm:$0xff]
        %v233 = vld [vmem:[%s148 + $0x1f0] sm:$0xff]
        %v234 = vld [vmem:[%s148 + $0x1f8] sm:$0xff]
        %v235 = vld [vmem:[%s148 + $0x200] sm:$0xff]
        %v236 = vld [vmem:[%s148 + $0x208] sm:$0xff]
        %v237 = vld [vmem:[%s148 + $0x210] sm:$0xff]
        %v238 = vld [vmem:[%s148 + $0x218] sm:$0xff]
        %v239 = vld [vmem:[%s148 + $0x220] sm:$0xff]
        %v240 = vld [vmem:[%s148 + $0x228] sm:$0xff]
        %v241 = vld [vmem:[%s148 + $0x230] sm:$0xff]
        %v242 = vld [vmem:[%s148 + $0x238] sm:$0xff]
        %v243 = vld [vmem:[%s148 + $0x240] sm:$0xff]
        %v244 = vld [vmem:[%s148 + $0x248] sm:$0xff]
        %v245 = vld [vmem:[%s148 + $0x250] sm:$0xff]
        %v246 = vld [vmem:[%s148 + $0x258] sm:$0xff]
        %v247 = vld [vmem:[%s148 + $0x260] sm:$0xff]
        %v248 = vld [vmem:[%s148 + $0x268] sm:$0xff]
        %v249 = vld [vmem:[%s148 + $0x270] sm:$0xff]
        %v250 = vld [vmem:[%s148 + $0x278] sm:$0xff]
        %v251 = vld [vmem:[%s148 + $0x280] sm:$0xff]
        %v252 = vld [vmem:[%s148 + $0x288] sm:$0xff]
        %v253 = vld [vmem:[%s148 + $0x290] sm:$0xff]
        %v254 = vld [vmem:[%s148 + $0x298] sm:$0xff]
        %v255 = vld [vmem:[%s148 + $0x2a0] sm:$0xff]
        %v256 = vld [vmem:[%s148 + $0x2a8] sm:$0xff]
        %v257 = vld [vmem:[%s148 + $0x2b0] sm:$0xff]
        %v258 = vld [vmem:[%s148 + $0x2b8] sm:$0xff]
        %v259 = vld [vmem:[%s148 + $0x2c0] sm:$0xff]
        %v260 = vld [vmem:[%s148 + $0x2c8] sm:$0xff]
        %v261 = vld [vmem:[%s148 + $0x2d0] sm:$0xff]
        %v262 = vld [vmem:[%s148 + $0x2d8] sm:$0xff]
        %v263 = vld [vmem:[%s148 + $0x2e0] sm:$0xff]
        %v264 = vld [vmem:[%s148 + $0x2e8] sm:$0xff]
        %v265 = vld [vmem:[%s148 + $0x2f0] sm:$0xff]
        %v266 = vld [vmem:[%s148 + $0x2f8] sm:$0xff]
        %v267 = vld [vmem:[%s148 + $0x300] sm:$0xff]
        %v268 = vld [vmem:[%s148 + $0x308] sm:$0xff]
        %v269 = vld [vmem:[%s148 + $0x310] sm:$0xff]
        %v270 = vld [vmem:[%s148 + $0x318] sm:$0xff]
        %v271 = vld [vmem:[%s148 + $0x320] sm:$0xff]
        %v272 = vld [vmem:[%s148 + $0x328] sm:$0xff]
        %v273 = vld [vmem:[%s148 + $0x330] sm:$0xff]
        %v274 = vld [vmem:[%s148 + $0x338] sm:$0xff]
        %v275 = vld [vmem:[%s148 + $0x340] sm:$0xff]
        %v276 = vld [vmem:[%s148 + $0x348] sm:$0xff]
        %v277 = vld [vmem:[%s148 + $0x350] sm:$0xff]
        %v278 = vld [vmem:[%s148 + $0x358] sm:$0xff]
        %v279 = vld [vmem:[%s148 + $0x360] sm:$0xff]
        %v280 = vld [vmem:[%s148 + $0x368] sm:$0xff]
        %v281 = vld [vmem:[%s148 + $0x370] sm:$0xff]
        %v282 = vld [vmem:[%s148 + $0x378] sm:$0xff]
        %v283 = vld [vmem:[%s148 + $0x380] sm:$0xff]
        %v284 = vld [vmem:[%s148 + $0x388] sm:$0xff]
        %v285 = vld [vmem:[%s148 + $0x390] sm:$0xff]
        %v286 = vld [vmem:[%s148 + $0x398] sm:$0xff]
        %v287 = vld [vmem:[%s148 + $0x3a0] sm:$0xff]
        %v288 = vld [vmem:[%s148 + $0x3a8] sm:$0xff]
        %v289 = vld [vmem:[%s148 + $0x3b0] sm:$0xff]
        %v290 = vld [vmem:[%s148 + $0x3b8] sm:$0xff]
        %v291 = vld [vmem:[%s148 + $0x3c0] sm:$0xff]
        %v292 = vld [vmem:[%s148 + $0x3c8] sm:$0xff]
        %v293 = vld [vmem:[%s148 + $0x3d0] sm:$0xff]
        %v294 = vld [vmem:[%s148 + $0x3d8] sm:$0xff]
        %v295 = vld [vmem:[%s148 + $0x3e0] sm:$0xff]
        %v296 = vld [vmem:[%s148 + $0x3e8] sm:$0xff]
        %v297 = vld [vmem:[%s148 + $0x3f0] sm:$0xff]
        %v298 = vld [vmem:[%s148 + $0x3f8] sm:$0xff]
        %v299 = vld [vmem:[%s148 + $0x400] sm:$0xff]
        %v300 = vld [vmem:[%s148 + $0x408] sm:$0xff]
        %v301 = vld [vmem:[%s148 + $0x410] sm:$0xff]
        %v302 = vld [vmem:[%s148 + $0x418] sm:$0xff]
        %v303 = vld [vmem:[%s148 + $0x420] sm:$0xff]
        %v304 = vld [vmem:[%s148 + $0x428] sm:$0xff]
        %v305 = vld [vmem:[%s148 + $0x430] sm:$0xff]
        %v306 = vld [vmem:[%s148 + $0x438] sm:$0xff]
        %v307 = vld [vmem:[%s148 + $0x440] sm:$0xff]
        %v308 = vld [vmem:[%s148 + $0x448] sm:$0xff]
        %v309 = vld [vmem:[%s148 + $0x450] sm:$0xff]
        %v310 = vld [vmem:[%s148 + $0x458] sm:$0xff]
        %v311 = vld [vmem:[%s148 + $0x460] sm:$0xff]
        %v312 = vld [vmem:[%s148 + $0x468] sm:$0xff]
        %v313 = vld [vmem:[%s148 + $0x470] sm:$0xff]
        %v314 = vld [vmem:[%s148 + $0x478] sm:$0xff]
        %v315 = vld [vmem:[%s148 + $0x480] sm:$0xff]
        %v316 = vld [vmem:[%s148 + $0x488] sm:$0xff]
        %v317 = vld [vmem:[%s148 + $0x490] sm:$0xff]
        %v318 = vld [vmem:[%s148 + $0x498] sm:$0xff]
        %v319 = vld [vmem:[%s148 + $0x4a0] sm:$0xff]
        %v320 = vld [vmem:[%s148 + $0x4a8] sm:$0xff]
        %v321 = vld [vmem:[%s148 + $0x4b0] sm:$0xff]
        %v322 = vld [vmem:[%s148 + $0x4b8] sm:$0xff]
        %v323 = vld [vmem:[%s148 + $0x4c0] sm:$0xff]
        %v324 = vld [vmem:[%s148 + $0x4c8] sm:$0xff]
        %v325 = vld [vmem:[%s148 + $0x4d0] sm:$0xff]
        %v326 = vld [vmem:[%s148 + $0x4d8] sm:$0xff]
        %v327 = vld [vmem:[%s148 + $0x4e0] sm:$0xff]
        %v328 = vld [vmem:[%s148 + $0x4e8] sm:$0xff]
        %v329 = vld [vmem:[%s148 + $0x4f0] sm:$0xff]
        %v330 = vld [vmem:[%s148 + $0x4f8] sm:$0xff]
        %v331 = vld [vmem:[%s148 + $0x500] sm:$0xff]
        %v332 = vld [vmem:[%s148 + $0x508] sm:$0xff]
        %v333 = vld [vmem:[%s148 + $0x510] sm:$0xff]
        %v334 = vld [vmem:[%s148 + $0x518] sm:$0xff]
        %v335 = vld [vmem:[%s148 + $0x520] sm:$0xff]
        %v336 = vld [vmem:[%s148 + $0x528] sm:$0xff]
        %v337 = vld [vmem:[%s148 + $0x530] sm:$0xff]
        %v338 = vld [vmem:[%s148 + $0x538] sm:$0xff]
        %v339 = vld [vmem:[%s148 + $0x540] sm:$0xff]
        %v340 = vld [vmem:[%s148 + $0x548] sm:$0xff]
        %v341 = vld [vmem:[%s148 + $0x550] sm:$0xff]
        %v342 = vld [vmem:[%s148 + $0x558] sm:$0xff]
        %v343 = vld [vmem:[%s148 + $0x560] sm:$0xff]
        %v344 = vld [vmem:[%s148 + $0x568] sm:$0xff]
        %v345 = vld [vmem:[%s148 + $0x570] sm:$0xff]
        %v346 = vld [vmem:[%s148 + $0x578] sm:$0xff]
        %v347 = vld [vmem:[%s148 + $0x580] sm:$0xff]
        %v348 = vld [vmem:[%s148 + $0x588] sm:$0xff]
        %v349 = vld [vmem:[%s148 + $0x590] sm:$0xff]
        %v350 = vld [vmem:[%s148 + $0x598] sm:$0xff]
        %v351 = vld [vmem:[%s148 + $0x5a0] sm:$0xff]
        %v352 = vld [vmem:[%s148 + $0x5a8] sm:$0xff]
        %v353 = vld [vmem:[%s148 + $0x5b0] sm:$0xff]
        %v354 = vld [vmem:[%s148 + $0x5b8] sm:$0xff]
        %v355 = vld [vmem:[%s148 + $0x5c0] sm:$0xff]
        %v356 = vld [vmem:[%s148 + $0x5c8] sm:$0xff]
        %v357 = vld [vmem:[%s148 + $0x5d0] sm:$0xff]
        %v358 = vld [vmem:[%s148 + $0x5d8] sm:$0xff]
        %v359 = vld [vmem:[%s148 + $0x5e0] sm:$0xff]
        %v360 = vld [vmem:[%s148 + $0x5e8] sm:$0xff]
        %v361 = vld [vmem:[%s148 + $0x5f0] sm:$0xff]
        %v362 = vld [vmem:[%s148 + $0x5f8] sm:$0xff]
        %v363 = vld [vmem:[%s148 + $0x600] sm:$0xff]
        %v364 = vld [vmem:[%s148 + $0x608] sm:$0xff]
        %v365 = vld [vmem:[%s148 + $0x610] sm:$0xff]
        %v366 = vld [vmem:[%s148 + $0x618] sm:$0xff]
        %v367 = vld [vmem:[%s148 + $0x620] sm:$0xff]
        %v368 = vld [vmem:[%s148 + $0x628] sm:$0xff]
        %v369 = vld [vmem:[%s148 + $0x630] sm:$0xff]
        %v370 = vld [vmem:[%s148 + $0x638] sm:$0xff]
        %v371 = vld [vmem:[%s148 + $0x640] sm:$0xff]
        %v372 = vld [vmem:[%s148 + $0x648] sm:$0xff]
        %v373 = vld [vmem:[%s148 + $0x650] sm:$0xff]
        %v374 = vld [vmem:[%s148 + $0x658] sm:$0xff]
        %v375 = vld [vmem:[%s148 + $0x660] sm:$0xff]
        %v376 = vld [vmem:[%s148 + $0x668] sm:$0xff]
        %v377 = vld [vmem:[%s148 + $0x670] sm:$0xff]
        %v378 = vld [vmem:[%s148 + $0x678] sm:$0xff]
        %v379 = vld [vmem:[%s148 + $0x680] sm:$0xff]
        %v380 = vld [vmem:[%s148 + $0x688] sm:$0xff]
        %v381 = vld [vmem:[%s148 + $0x690] sm:$0xff]
        %v382 = vld [vmem:[%s148 + $0x698] sm:$0xff]
        %v383 = vld [vmem:[%s148 + $0x6a0] sm:$0xff]
        %v384 = vld [vmem:[%s148 + $0x6a8] sm:$0xff]
        %v385 = vld [vmem:[%s148 + $0x6b0] sm:$0xff]
        %v386 = vld [vmem:[%s148 + $0x6b8] sm:$0xff]
        %v387 = vld [vmem:[%s148 + $0x6c0] sm:$0xff]
        %v388 = vld [vmem:[%s148 + $0x6c8] sm:$0xff]
        %v389 = vld [vmem:[%s148 + $0x6d0] sm:$0xff]
        %v390 = vld [vmem:[%s148 + $0x6d8] sm:$0xff]
        %v391 = vld [vmem:[%s148 + $0x6e0] sm:$0xff]
        %v392 = vld [vmem:[%s148 + $0x6e8] sm:$0xff]
        %v393 = vld [vmem:[%s148 + $0x6f0] sm:$0xff]
        %v394 = vld [vmem:[%s148 + $0x6f8] sm:$0xff]
        %v395 = vld [vmem:[%s148 + $0x700] sm:$0xff]
        %v396 = vld [vmem:[%s148 + $0x708] sm:$0xff]
        %v397 = vld [vmem:[%s148 + $0x710] sm:$0xff]
        %v398 = vld [vmem:[%s148 + $0x718] sm:$0xff]
        %v399 = vld [vmem:[%s148 + $0x720] sm:$0xff]
        %v400 = vld [vmem:[%s148 + $0x728] sm:$0xff]
        %v401 = vld [vmem:[%s148 + $0x730] sm:$0xff]
        %v402 = vld [vmem:[%s148 + $0x738] sm:$0xff]
        %v403 = vld [vmem:[%s148 + $0x740] sm:$0xff]
        %v404 = vld [vmem:[%s148 + $0x748] sm:$0xff]
        %v405 = vld [vmem:[%s148 + $0x750] sm:$0xff]
        %v406 = vld [vmem:[%s148 + $0x758] sm:$0xff]
        %v407 = vld [vmem:[%s148 + $0x760] sm:$0xff]
        %v408 = vld [vmem:[%s148 + $0x768] sm:$0xff]
        %v409 = vld [vmem:[%s148 + $0x770] sm:$0xff]
        %v410 = vld [vmem:[%s148 + $0x778] sm:$0xff]
        %v411 = vld [vmem:[%s148 + $0x780] sm:$0xff]
        %v412 = vld [vmem:[%s148 + $0x788] sm:$0xff]
        %v413 = vld [vmem:[%s148 + $0x790] sm:$0xff]
        %v414 = vld [vmem:[%s148 + $0x798] sm:$0xff]
        %v415 = vld [vmem:[%s148 + $0x7a0] sm:$0xff]
        %v416 = vld [vmem:[%s148 + $0x7a8] sm:$0xff]
        %v417 = vld [vmem:[%s148 + $0x7b0] sm:$0xff]
        %v418 = vld [vmem:[%s148 + $0x7b8] sm:$0xff]
        %v419 = vld [vmem:[%s148 + $0x7c0] sm:$0xff]
        %v420 = vld [vmem:[%s148 + $0x7c8] sm:$0xff]
        %v421 = vld [vmem:[%s148 + $0x7d0] sm:$0xff]
        %v422 = vld [vmem:[%s148 + $0x7d8] sm:$0xff]
        %v423 = vld [vmem:[%s148 + $0x7e0] sm:$0xff]
        %v424 = vld [vmem:[%s148 + $0x7e8] sm:$0xff]
        %v425 = vld [vmem:[%s148 + $0x7f0] sm:$0xff]
        %v426 = vld [vmem:[%s148 + $0x7f8] sm:$0xff]
        %v427 = vld [vmem:[%s148 + $0x800] sm:$0xff]
        %v428 = vld [vmem:[%s148 + $0x808] sm:$0xff]
        %v429 = vld [vmem:[%s148 + $0x810] sm:$0xff]
        %v430 = vld [vmem:[%s148 + $0x818] sm:$0xff]
        %v431 = vld [vmem:[%s148 + $0x820] sm:$0xff]
        %v432 = vld [vmem:[%s148 + $0x828] sm:$0xff]
        %v433 = vld [vmem:[%s148 + $0x830] sm:$0xff]
        %v434 = vld [vmem:[%s148 + $0x838] sm:$0xff]
        %v435 = vld [vmem:[%s148 + $0x840] sm:$0xff]
        %v436 = vld [vmem:[%s148 + $0x848] sm:$0xff]
        %v437 = vld [vmem:[%s148 + $0x850] sm:$0xff]
        %v438 = vld [vmem:[%s148 + $0x858] sm:$0xff]
        %v439 = vld [vmem:[%s148 + $0x860] sm:$0xff]
        %v440 = vld [vmem:[%s148 + $0x868] sm:$0xff]
        %v441 = vld [vmem:[%s148 + $0x870] sm:$0xff]
        %v442 = vld [vmem:[%s148 + $0x878] sm:$0xff]
        %v443 = vld [vmem:[%s148 + $0x880] sm:$0xff]
        %v444 = vld [vmem:[%s148 + $0x888] sm:$0xff]
        %v445 = vld [vmem:[%s148 + $0x890] sm:$0xff]
        %v446 = vld [vmem:[%s148 + $0x898] sm:$0xff]
        %v447 = vld [vmem:[%s148 + $0x8a0] sm:$0xff]
        %v448 = vld [vmem:[%s148 + $0x8a8] sm:$0xff]
        %v449 = vld [vmem:[%s148 + $0x8b0] sm:$0xff]
        %v450 = vld [vmem:[%s148 + $0x8b8] sm:$0xff]
        %v451 = vld [vmem:[%s148 + $0x8c0] sm:$0xff]
        %v452 = vld [vmem:[%s148 + $0x8c8] sm:$0xff]
        %v453 = vld [vmem:[%s148 + $0x8d0] sm:$0xff]
        %v454 = vld [vmem:[%s148 + $0x8d8] sm:$0xff]
        %v455 = vld [vmem:[%s148 + $0x8e0] sm:$0xff]
        %v456 = vld [vmem:[%s148 + $0x8e8] sm:$0xff]
        %v457 = vld [vmem:[%s148 + $0x8f0] sm:$0xff]
        %v458 = vld [vmem:[%s148 + $0x8f8] sm:$0xff]
        %v459 = vld [vmem:[%s148 + $0x900] sm:$0xff]
        %v460 = vld [vmem:[%s148 + $0x908] sm:$0xff]
        %v461 = vld [vmem:[%s148 + $0x910] sm:$0xff]
        %v462 = vld [vmem:[%s148 + $0x918] sm:$0xff]
        %v463 = vld [vmem:[%s148 + $0x920] sm:$0xff]
        %v464 = vld [vmem:[%s148 + $0x928] sm:$0xff]
        %v465 = vld [vmem:[%s148 + $0x930] sm:$0xff]
        %v466 = vld [vmem:[%s148 + $0x938] sm:$0xff]
        %v467 = vld [vmem:[%s148 + $0x940] sm:$0xff]
        %v468 = vld [vmem:[%s148 + $0x948] sm:$0xff]
        %v469 = vld [vmem:[%s148 + $0x950] sm:$0xff]
        %v470 = vld [vmem:[%s148 + $0x958] sm:$0xff]
        %v471 = vld [vmem:[%s148 + $0x960] sm:$0xff]
        %v472 = vld [vmem:[%s148 + $0x968] sm:$0xff]
        %v473 = vld [vmem:[%s148 + $0x970] sm:$0xff]
        %v474 = vld [vmem:[%s148 + $0x978] sm:$0xff]
        %v475 = vld [vmem:[%s148 + $0x980] sm:$0xff]
        %v476 = vld [vmem:[%s148 + $0x988] sm:$0xff]
        %v477 = vld [vmem:[%s148 + $0x990] sm:$0xff]
        %v478 = vld [vmem:[%s148 + $0x998] sm:$0xff]
        %v479 = vld [vmem:[%s148 + $0x9a0] sm:$0xff]
        %v480 = vld [vmem:[%s148 + $0x9a8] sm:$0xff]
        %v481 = vld [vmem:[%s148 + $0x9b0] sm:$0xff]
        %v482 = vld [vmem:[%s148 + $0x9b8] sm:$0xff]
        %v483 = vld [vmem:[%s148 + $0x9c0] sm:$0xff]
        %v484 = vld [vmem:[%s148 + $0x9c8] sm:$0xff]
        %v485 = vld [vmem:[%s148 + $0x9d0] sm:$0xff]
        %v486 = vld [vmem:[%s148 + $0x9d8] sm:$0xff]
        %v487 = vld [vmem:[%s148 + $0x9e0] sm:$0xff]
        %v488 = vld [vmem:[%s148 + $0x9e8] sm:$0xff]
        %v489 = vld [vmem:[%s148 + $0x9f0] sm:$0xff]
        %v490 = vld [vmem:[%s148 + $0x9f8] sm:$0xff]
        %v491 = vld [vmem:[%s148 + $0xa00] sm:$0xff]
        %v492 = vld [vmem:[%s148 + $0xa08] sm:$0xff]
        %v493 = vld [vmem:[%s148 + $0xa10] sm:$0xff]
        %v494 = vld [vmem:[%s148 + $0xa18] sm:$0xff]
        %v495 = vld [vmem:[%s148 + $0xa20] sm:$0xff]
        %v496 = vld [vmem:[%s148 + $0xa28] sm:$0xff]
        %v497 = vld [vmem:[%s148 + $0xa30] sm:$0xff]
        %v498 = vld [vmem:[%s148 + $0xa38] sm:$0xff]
        %v499 = vld [vmem:[%s148 + $0xa40] sm:$0xff]
        %v500 = vld [vmem:[%s148 + $0xa48] sm:$0xff]
        %v501 = vld [vmem:[%s148 + $0xa50] sm:$0xff]
        %v502 = vld [vmem:[%s148 + $0xa58] sm:$0xff]
        %v503 = vld [vmem:[%s148 + $0xa60] sm:$0xff]
        %v504 = vld [vmem:[%s148 + $0xa68] sm:$0xff]
        %v505 = vld [vmem:[%s148 + $0xa70] sm:$0xff]
        %v506 = vld [vmem:[%s148 + $0xa78] sm:$0xff]
        %v507 = vld [vmem:[%s148 + $0xa80] sm:$0xff]
        %v508 = vld [vmem:[%s148 + $0xa88] sm:$0xff]
        %v509 = vld [vmem:[%s148 + $0xa90] sm:$0xff]
        %v510 = vld [vmem:[%s148 + $0xa98] sm:$0xff]
        %v511 = vld [vmem:[%s148 + $0xaa0] sm:$0xff]
        %v512 = vld [vmem:[%s148 + $0xaa8] sm:$0xff]
        %v513 = vld [vmem:[%s148 + $0xab0] sm:$0xff]
        %v514 = vld [vmem:[%s148 + $0xab8] sm:$0xff]
        %v515 = vld [vmem:[%s148 + $0xac0] sm:$0xff]
        %v516 = vld [vmem:[%s148 + $0xac8] sm:$0xff]
        %v517 = vld [vmem:[%s148 + $0xad0] sm:$0xff]
        %v518 = vld [vmem:[%s148 + $0xad8] sm:$0xff]
        %v519 = vld [vmem:[%s148 + $0xae0] sm:$0xff]
        %v520 = vld [vmem:[%s148 + $0xae8] sm:$0xff]
        %v521 = vld [vmem:[%s148 + $0xaf0] sm:$0xff]
        %v522 = vld [vmem:[%s148 + $0xaf8] sm:$0xff]
        %v523 = vld [vmem:[%s148 + $0xb00] sm:$0xff]
        %v524 = vld [vmem:[%s148 + $0xb08] sm:$0xff]
        %v525 = vld [vmem:[%s148 + $0xb10] sm:$0xff]
        %v526 = vld [vmem:[%s148 + $0xb18] sm:$0xff]
        %v527 = vld [vmem:[%s148 + $0xb20] sm:$0xff]
        %v528 = vld [vmem:[%s148 + $0xb28] sm:$0xff]
        %v529 = vld [vmem:[%s148 + $0xb30] sm:$0xff]
        %v530 = vld [vmem:[%s148 + $0xb38] sm:$0xff]
        %v531 = vld [vmem:[%s148 + $0xb40] sm:$0xff]
        %v532 = vld [vmem:[%s148 + $0xb48] sm:$0xff]
        %v533 = vld [vmem:[%s148 + $0xb50] sm:$0xff]
        %v534 = vld [vmem:[%s148 + $0xb58] sm:$0xff]
        %v535 = vld [vmem:[%s148 + $0xb60] sm:$0xff]
        %v536 = vld [vmem:[%s148 + $0xb68] sm:$0xff]
        %v537 = vld [vmem:[%s148 + $0xb70] sm:$0xff]
        %v538 = vld [vmem:[%s148 + $0xb78] sm:$0xff]
        %v539 = vld [vmem:[%s148 + $0xb80] sm:$0xff]
        %v540 = vld [vmem:[%s148 + $0xb88] sm:$0xff]
        %v541 = vld [vmem:[%s148 + $0xb90] sm:$0xff]
        %v542 = vld [vmem:[%s148 + $0xb98] sm:$0xff]
        %v543 = vld [vmem:[%s148 + $0xba0] sm:$0xff]
        %v544 = vld [vmem:[%s148 + $0xba8] sm:$0xff]
        %v545 = vld [vmem:[%s148 + $0xbb0] sm:$0xff]
        %v546 = vld [vmem:[%s148 + $0xbb8] sm:$0xff]
        %v547 = vld [vmem:[%s148 + $0xbc0] sm:$0xff]
        %v548 = vld [vmem:[%s148 + $0xbc8] sm:$0xff]
        %v549 = vld [vmem:[%s148 + $0xbd0] sm:$0xff]
        %v550 = vld [vmem:[%s148 + $0xbd8] sm:$0xff]
        %v551 = vld [vmem:[%s148 + $0xbe0] sm:$0xff]
        %v552 = vld [vmem:[%s148 + $0xbe8] sm:$0xff]
        %v553 = vld [vmem:[%s148 + $0xbf0] sm:$0xff]
        %v554 = vld [vmem:[%s148 + $0xbf8] sm:$0xff]
        %v555 = vld [vmem:[%s148 + $0xc00] sm:$0xff]
        %v556 = vld [vmem:[%s148 + $0xc08] sm:$0xff]
        %v557 = vld [vmem:[%s148 + $0xc10] sm:$0xff]
        %v558 = vld [vmem:[%s148 + $0xc18] sm:$0xff]
        %v559 = vld [vmem:[%s148 + $0xc20] sm:$0xff]
        %v560 = vld [vmem:[%s148 + $0xc28] sm:$0xff]
        %v561 = vld [vmem:[%s148 + $0xc30] sm:$0xff]
        %v562 = vld [vmem:[%s148 + $0xc38] sm:$0xff]
        %v563 = vld [vmem:[%s148 + $0xc40] sm:$0xff]
        %v564 = vld [vmem:[%s148 + $0xc48] sm:$0xff]
        %v565 = vld [vmem:[%s148 + $0xc50] sm:$0xff]
        %v566 = vld [vmem:[%s148 + $0xc58] sm:$0xff]
        %v567 = vld [vmem:[%s148 + $0xc60] sm:$0xff]
        %v568 = vld [vmem:[%s148 + $0xc68] sm:$0xff]
        %v569 = vld [vmem:[%s148 + $0xc70] sm:$0xff]
        %v570 = vld [vmem:[%s148 + $0xc78] sm:$0xff]
        %v571 = vld [vmem:[%s148 + $0xc80] sm:$0xff]
        %v572 = vld [vmem:[%s148 + $0xc88] sm:$0xff]
        %v573 = vld [vmem:[%s148 + $0xc90] sm:$0xff]
        %v574 = vld [vmem:[%s148 + $0xc98] sm:$0xff]
        %v575 = vld [vmem:[%s148 + $0xca0] sm:$0xff]
        %v576 = vld [vmem:[%s148 + $0xca8] sm:$0xff]
        %v577 = vld [vmem:[%s148 + $0xcb0] sm:$0xff]
        %v578 = vld [vmem:[%s148 + $0xcb8] sm:$0xff]
        %v579 = vld [vmem:[%s148 + $0xcc0] sm:$0xff]
        %v580 = vld [vmem:[%s148 + $0xcc8] sm:$0xff]
        %v581 = vld [vmem:[%s148 + $0xcd0] sm:$0xff]
        %v582 = vld [vmem:[%s148 + $0xcd8] sm:$0xff]
        %v583 = vld [vmem:[%s148 + $0xce0] sm:$0xff]
        %v584 = vld [vmem:[%s148 + $0xce8] sm:$0xff]
        %v585 = vld [vmem:[%s148 + $0xcf0] sm:$0xff]
        %v586 = vld [vmem:[%s148 + $0xcf8] sm:$0xff]
        %v587 = vld [vmem:[%s148 + $0xd00] sm:$0xff]
        %v588 = vld [vmem:[%s148 + $0xd08] sm:$0xff]
        %v589 = vld [vmem:[%s148 + $0xd10] sm:$0xff]
        %v590 = vld [vmem:[%s148 + $0xd18] sm:$0xff]
        %v591 = vld [vmem:[%s148 + $0xd20] sm:$0xff]
        %v592 = vld [vmem:[%s148 + $0xd28] sm:$0xff]
        %v593 = vld [vmem:[%s148 + $0xd30] sm:$0xff]
        %v594 = vld [vmem:[%s148 + $0xd38] sm:$0xff]
        %v595 = vld [vmem:[%s148 + $0xd40] sm:$0xff]
        %v596 = vld [vmem:[%s148 + $0xd48] sm:$0xff]
        %v597 = vld [vmem:[%s148 + $0xd50] sm:$0xff]
        %v598 = vld [vmem:[%s148 + $0xd58] sm:$0xff]
        %v599 = vld [vmem:[%s148 + $0xd60] sm:$0xff]
        %v600 = vld [vmem:[%s148 + $0xd68] sm:$0xff]
        %v601 = vld [vmem:[%s148 + $0xd70] sm:$0xff]
        %v602 = vld [vmem:[%s148 + $0xd78] sm:$0xff]
        %v603 = vld [vmem:[%s148 + $0xd80] sm:$0xff]
        %v604 = vld [vmem:[%s148 + $0xd88] sm:$0xff]
        %v605 = vld [vmem:[%s148 + $0xd90] sm:$0xff]
        %v606 = vld [vmem:[%s148 + $0xd98] sm:$0xff]
        %v607 = vld [vmem:[%s148 + $0xda0] sm:$0xff]
        %v608 = vld [vmem:[%s148 + $0xda8] sm:$0xff]
        %v609 = vld [vmem:[%s148 + $0xdb0] sm:$0xff]
        %v610 = vld [vmem:[%s148 + $0xdb8] sm:$0xff]
        %v611 = vld [vmem:[%s148 + $0xdc0] sm:$0xff]
        %v612 = vld [vmem:[%s148 + $0xdc8] sm:$0xff]
        %v613 = vld [vmem:[%s148 + $0xdd0] sm:$0xff]
        %v614 = vld [vmem:[%s148 + $0xdd8] sm:$0xff]
        %v615 = vld [vmem:[%s148 + $0xde0] sm:$0xff]
        %v616 = vld [vmem:[%s148 + $0xde8] sm:$0xff]
        %v617 = vld [vmem:[%s148 + $0xdf0] sm:$0xff]
        %v618 = vld [vmem:[%s148 + $0xdf8] sm:$0xff]
        %v619 = vld [vmem:[%s148 + $0xe00] sm:$0xff]
        %v620 = vld [vmem:[%s148 + $0xe08] sm:$0xff]
        %v621 = vld [vmem:[%s148 + $0xe10] sm:$0xff]
        %v622 = vld [vmem:[%s148 + $0xe18] sm:$0xff]
        %v623 = vld [vmem:[%s148 + $0xe20] sm:$0xff]
        %v624 = vld [vmem:[%s148 + $0xe28] sm:$0xff]
        %v625 = vld [vmem:[%s148 + $0xe30] sm:$0xff]
        %v626 = vld [vmem:[%s148 + $0xe38] sm:$0xff]
        %v627 = vld [vmem:[%s148 + $0xe40] sm:$0xff]
        %v628 = vld [vmem:[%s148 + $0xe48] sm:$0xff]
        %v629 = vld [vmem:[%s148 + $0xe50] sm:$0xff]
        %v630 = vld [vmem:[%s148 + $0xe58] sm:$0xff]
        %v631 = vld [vmem:[%s148 + $0xe60] sm:$0xff]
        %v632 = vld [vmem:[%s148 + $0xe68] sm:$0xff]
        %v633 = vld [vmem:[%s148 + $0xe70] sm:$0xff]
        %v634 = vld [vmem:[%s148 + $0xe78] sm:$0xff]
        %v635 = vld [vmem:[%s148 + $0xe80] sm:$0xff]
        %v636 = vld [vmem:[%s148 + $0xe88] sm:$0xff]
        %v637 = vld [vmem:[%s148 + $0xe90] sm:$0xff]
        %v638 = vld [vmem:[%s148 + $0xe98] sm:$0xff]
        %v639 = vld [vmem:[%s148 + $0xea0] sm:$0xff]
        %v640 = vld [vmem:[%s148 + $0xea8] sm:$0xff]
        %v641 = vld [vmem:[%s148 + $0xeb0] sm:$0xff]
        %v642 = vld [vmem:[%s148 + $0xeb8] sm:$0xff]
        %v643 = vld [vmem:[%s148 + $0xec0] sm:$0xff]
        %v644 = vld [vmem:[%s148 + $0xec8] sm:$0xff]
        %v645 = vld [vmem:[%s148 + $0xed0] sm:$0xff]
        %v646 = vld [vmem:[%s148 + $0xed8] sm:$0xff]
        %v647 = vld [vmem:[%s148 + $0xee0] sm:$0xff]
        %v648 = vld [vmem:[%s148 + $0xee8] sm:$0xff]
        %v649 = vld [vmem:[%s148 + $0xef0] sm:$0xff]
        %v650 = vld [vmem:[%s148 + $0xef8] sm:$0xff]
        %v651 = vld [vmem:[%s148 + $0xf00] sm:$0xff]
        %v652 = vld [vmem:[%s148 + $0xf08] sm:$0xff]
        %v653 = vld [vmem:[%s148 + $0xf10] sm:$0xff]
        %v654 = vld [vmem:[%s148 + $0xf18] sm:$0xff]
        %v655 = vld [vmem:[%s148 + $0xf20] sm:$0xff]
        %v656 = vld [vmem:[%s148 + $0xf28] sm:$0xff]
        %v657 = vld [vmem:[%s148 + $0xf30] sm:$0xff]
        %v658 = vld [vmem:[%s148 + $0xf38] sm:$0xff]
        %v659 = vld [vmem:[%s148 + $0xf40] sm:$0xff]
        %v660 = vld [vmem:[%s148 + $0xf48] sm:$0xff]
        %v661 = vld [vmem:[%s148 + $0xf50] sm:$0xff]
        %v662 = vld [vmem:[%s148 + $0xf58] sm:$0xff]
        %v663 = vld [vmem:[%s148 + $0xf60] sm:$0xff]
        %v664 = vld [vmem:[%s148 + $0xf68] sm:$0xff]
        %v665 = vld [vmem:[%s148 + $0xf70] sm:$0xff]
        %v666 = vld [vmem:[%s148 + $0xf78] sm:$0xff]
        %v667 = vld [vmem:[%s148 + $0xf80] sm:$0xff]
        %v668 = vld [vmem:[%s148 + $0xf88] sm:$0xff]
        %v669 = vld [vmem:[%s148 + $0xf90] sm:$0xff]
        %v670 = vld [vmem:[%s148 + $0xf98] sm:$0xff]
        %v671 = vld [vmem:[%s148 + $0xfa0] sm:$0xff]
        %v672 = vld [vmem:[%s148 + $0xfa8] sm:$0xff]
        %v673 = vld [vmem:[%s148 + $0xfb0] sm:$0xff]
        %v674 = vld [vmem:[%s148 + $0xfb8] sm:$0xff]
        %v675 = vld [vmem:[%s148 + $0xfc0] sm:$0xff]
        %v676 = vld [vmem:[%s148 + $0xfc8] sm:$0xff]
        %v677 = vld [vmem:[%s148 + $0xfd0] sm:$0xff]
        %v678 = vld [vmem:[%s148 + $0xfd8] sm:$0xff]
        %v679 = vld [vmem:[%s148 + $0xfe0] sm:$0xff]
        %v680 = vld [vmem:[%s148 + $0xfe8] sm:$0xff]
        %v681 = vld [vmem:[%s148 + $0xff0] sm:$0xff]
        %v682 = vld [vmem:[%s148 + $0xff8] sm:$0xff]
        %683 = vxpose.xlu0.b32.start [1/16] %v171, 128
        %684 = vxpose.xlu0.b32.cont [2/16] %v175, 128
        %685 = vxpose.xlu0.b32.cont [3/16] %v179, 128
        %686 = vxpose.xlu0.b32.cont [4/16] %v183, 128
        %687 = vxpose.xlu0.b32.cont [5/16] %v187, 128
        %688 = vxpose.xlu0.b32.cont [6/16] %v191, 128
        %689 = vxpose.xlu0.b32.cont [7/16] %v195, 128
        %690 = vxpose.xlu0.b32.cont [8/16] %v199, 128
        %691 = vxpose.xlu0.b32.cont [9/16] %v203, 128
        %692 = vxpose.xlu0.b32.cont [10/16] %v207, 128
        %693 = vxpose.xlu0.b32.cont [11/16] %v211, 128
        %694 = vxpose.xlu0.b32.cont [12/16] %v215, 128
        %695 = vxpose.xlu0.b32.cont [13/16] %v219, 128
        %696 = vxpose.xlu0.b32.cont [14/16] %v223, 128
        %697 = vxpose.xlu0.b32.cont [15/16] %v227, 128
        %698 = vxpose.xlu0.b32.end [16/16] %v231, 128
        %v699 = vpop.trf.xlu0
        %v700 = vpop.trf.xlu0
        %v701 = vpop.trf.xlu0
        %v702 = vpop.trf.xlu0
        %v703 = vpop.trf.xlu0
        %v704 = vpop.trf.xlu0
        %v705 = vpop.trf.xlu0
        %v706 = vpop.trf.xlu0
        %v707 = vpop.trf.xlu0
        %v708 = vpop.trf.xlu0
        %v709 = vpop.trf.xlu0
        %v710 = vpop.trf.xlu0
        %v711 = vpop.trf.xlu0
        %v712 = vpop.trf.xlu0
        %v713 = vpop.trf.xlu0
        %v714 = vpop.trf.xlu0
        %715 = vxpose.xlu0.b32.start [1/16] %v172, 128
        %716 = vxpose.xlu0.b32.cont [2/16] %v176, 128
        %717 = vxpose.xlu0.b32.cont [3/16] %v180, 128
        %718 = vxpose.xlu0.b32.cont [4/16] %v184, 128
        %719 = vxpose.xlu0.b32.cont [5/16] %v188, 128
        %720 = vxpose.xlu0.b32.cont [6/16] %v192, 128
        %721 = vxpose.xlu0.b32.cont [7/16] %v196, 128
        %722 = vxpose.xlu0.b32.cont [8/16] %v200, 128
        %723 = vxpose.xlu0.b32.cont [9/16] %v204, 128
        %724 = vxpose.xlu0.b32.cont [10/16] %v208, 128
        %725 = vxpose.xlu0.b32.cont [11/16] %v212, 128
        %726 = vxpose.xlu0.b32.cont [12/16] %v216, 128
        %727 = vxpose.xlu0.b32.cont [13/16] %v220, 128
        %728 = vxpose.xlu0.b32.cont [14/16] %v224, 128
        %729 = vxpose.xlu0.b32.cont [15/16] %v228, 128
        %730 = vxpose.xlu0.b32.end [16/16] %v232, 128
        %v731 = vpop.trf.xlu0
        %v732 = vpop.trf.xlu0
        %v733 = vpop.trf.xlu0
        %v734 = vpop.trf.xlu0
        %v735 = vpop.trf.xlu0
        %v736 = vpop.trf.xlu0
        %v737 = vpop.trf.xlu0
        %v738 = vpop.trf.xlu0
        %v739 = vpop.trf.xlu0
        %v740 = vpop.trf.xlu0
        %v741 = vpop.trf.xlu0
        %v742 = vpop.trf.xlu0
        %v743 = vpop.trf.xlu0
        %v744 = vpop.trf.xlu0
        %v745 = vpop.trf.xlu0
        %v746 = vpop.trf.xlu0
        %747 = vxpose.xlu0.b32.start [1/16] %v173, 128
        %748 = vxpose.xlu0.b32.cont [2/16] %v177, 128
        %749 = vxpose.xlu0.b32.cont [3/16] %v181, 128
        %750 = vxpose.xlu0.b32.cont [4/16] %v185, 128
        %751 = vxpose.xlu0.b32.cont [5/16] %v189, 128
        %752 = vxpose.xlu0.b32.cont [6/16] %v193, 128
        %753 = vxpose.xlu0.b32.cont [7/16] %v197, 128
        %754 = vxpose.xlu0.b32.cont [8/16] %v201, 128
        %755 = vxpose.xlu0.b32.cont [9/16] %v205, 128
        %756 = vxpose.xlu0.b32.cont [10/16] %v209, 128
        %757 = vxpose.xlu0.b32.cont [11/16] %v213, 128
        %758 = vxpose.xlu0.b32.cont [12/16] %v217, 128
        %759 = vxpose.xlu0.b32.cont [13/16] %v221, 128
        %760 = vxpose.xlu0.b32.cont [14/16] %v225, 128
        %761 = vxpose.xlu0.b32.cont [15/16] %v229, 128
        %762 = vxpose.xlu0.b32.end [16/16] %v233, 128
        %v763 = vpop.trf.xlu0
        %v764 = vpop.trf.xlu0
        %v765 = vpop.trf.xlu0
        %v766 = vpop.trf.xlu0
        %v767 = vpop.trf.xlu0
        %v768 = vpop.trf.xlu0
        %v769 = vpop.trf.xlu0
        %v770 = vpop.trf.xlu0
        %v771 = vpop.trf.xlu0
        %v772 = vpop.trf.xlu0
        %v773 = vpop.trf.xlu0
        %v774 = vpop.trf.xlu0
        %v775 = vpop.trf.xlu0
        %v776 = vpop.trf.xlu0
        %v777 = vpop.trf.xlu0
        %v778 = vpop.trf.xlu0
        %779 = vxpose.xlu0.b32.start [1/16] %v174, 128
        %780 = vxpose.xlu0.b32.cont [2/16] %v178, 128
        %781 = vxpose.xlu0.b32.cont [3/16] %v182, 128
        %782 = vxpose.xlu0.b32.cont [4/16] %v186, 128
        %783 = vxpose.xlu0.b32.cont [5/16] %v190, 128
        %784 = vxpose.xlu0.b32.cont [6/16] %v194, 128
        %785 = vxpose.xlu0.b32.cont [7/16] %v198, 128
        %786 = vxpose.xlu0.b32.cont [8/16] %v202, 128
        %787 = vxpose.xlu0.b32.cont [9/16] %v206, 128
        %788 = vxpose.xlu0.b32.cont [10/16] %v210, 128
        %789 = vxpose.xlu0.b32.cont [11/16] %v214, 128
        %790 = vxpose.xlu0.b32.cont [12/16] %v218, 128
        %791 = vxpose.xlu0.b32.cont [13/16] %v222, 128
        %792 = vxpose.xlu0.b32.cont [14/16] %v226, 128
        %793 = vxpose.xlu0.b32.cont [15/16] %v230, 128
        %794 = vxpose.xlu0.b32.end [16/16] %v234, 128
        %v795 = vpop.trf.xlu0
        %v796 = vpop.trf.xlu0
        %v797 = vpop.trf.xlu0
        %v798 = vpop.trf.xlu0
        %v799 = vpop.trf.xlu0
        %v800 = vpop.trf.xlu0
        %v801 = vpop.trf.xlu0
        %v802 = vpop.trf.xlu0
        %v803 = vpop.trf.xlu0
        %v804 = vpop.trf.xlu0
        %v805 = vpop.trf.xlu0
        %v806 = vpop.trf.xlu0
        %v807 = vpop.trf.xlu0
        %v808 = vpop.trf.xlu0
        %v809 = vpop.trf.xlu0
        %v810 = vpop.trf.xlu0
        %811 = vxpose.xlu0.b32.start [1/16] %v235, 128
        %812 = vxpose.xlu0.b32.cont [2/16] %v239, 128
        %813 = vxpose.xlu0.b32.cont [3/16] %v243, 128
        %814 = vxpose.xlu0.b32.cont [4/16] %v247, 128
        %815 = vxpose.xlu0.b32.cont [5/16] %v251, 128
        %816 = vxpose.xlu0.b32.cont [6/16] %v255, 128
        %817 = vxpose.xlu0.b32.cont [7/16] %v259, 128
        %818 = vxpose.xlu0.b32.cont [8/16] %v263, 128
        %819 = vxpose.xlu0.b32.cont [9/16] %v267, 128
        %820 = vxpose.xlu0.b32.cont [10/16] %v271, 128
        %821 = vxpose.xlu0.b32.cont [11/16] %v275, 128
        %822 = vxpose.xlu0.b32.cont [12/16] %v279, 128
        %823 = vxpose.xlu0.b32.cont [13/16] %v283, 128
        %824 = vxpose.xlu0.b32.cont [14/16] %v287, 128
        %825 = vxpose.xlu0.b32.cont [15/16] %v291, 128
        %826 = vxpose.xlu0.b32.end [16/16] %v295, 128
        %v827 = vpop.trf.xlu0
        %v828 = vpop.trf.xlu0
        %v829 = vpop.trf.xlu0
        %v830 = vpop.trf.xlu0
        %v831 = vpop.trf.xlu0
        %v832 = vpop.trf.xlu0
        %v833 = vpop.trf.xlu0
        %v834 = vpop.trf.xlu0
        %v835 = vpop.trf.xlu0
        %v836 = vpop.trf.xlu0
        %v837 = vpop.trf.xlu0
        %v838 = vpop.trf.xlu0
        %v839 = vpop.trf.xlu0
        %v840 = vpop.trf.xlu0
        %v841 = vpop.trf.xlu0
        %v842 = vpop.trf.xlu0
        %843 = vxpose.xlu0.b32.start [1/16] %v236, 128
        %844 = vxpose.xlu0.b32.cont [2/16] %v240, 128
        %845 = vxpose.xlu0.b32.cont [3/16] %v244, 128
        %846 = vxpose.xlu0.b32.cont [4/16] %v248, 128
        %847 = vxpose.xlu0.b32.cont [5/16] %v252, 128
        %848 = vxpose.xlu0.b32.cont [6/16] %v256, 128
        %849 = vxpose.xlu0.b32.cont [7/16] %v260, 128
        %850 = vxpose.xlu0.b32.cont [8/16] %v264, 128
        %851 = vxpose.xlu0.b32.cont [9/16] %v268, 128
        %852 = vxpose.xlu0.b32.cont [10/16] %v272, 128
        %853 = vxpose.xlu0.b32.cont [11/16] %v276, 128
        %854 = vxpose.xlu0.b32.cont [12/16] %v280, 128
        %855 = vxpose.xlu0.b32.cont [13/16] %v284, 128
        %856 = vxpose.xlu0.b32.cont [14/16] %v288, 128
        %857 = vxpose.xlu0.b32.cont [15/16] %v292, 128
        %858 = vxpose.xlu0.b32.end [16/16] %v296, 128
        %v859 = vpop.trf.xlu0
        %v860 = vpop.trf.xlu0
        %v861 = vpop.trf.xlu0
        %v862 = vpop.trf.xlu0
        %v863 = vpop.trf.xlu0
        %v864 = vpop.trf.xlu0
        %v865 = vpop.trf.xlu0
        %v866 = vpop.trf.xlu0
        %v867 = vpop.trf.xlu0
        %v868 = vpop.trf.xlu0
        %v869 = vpop.trf.xlu0
        %v870 = vpop.trf.xlu0
        %v871 = vpop.trf.xlu0
        %v872 = vpop.trf.xlu0
        %v873 = vpop.trf.xlu0
        %v874 = vpop.trf.xlu0
        %875 = vxpose.xlu0.b32.start [1/16] %v237, 128
        %876 = vxpose.xlu0.b32.cont [2/16] %v241, 128
        %877 = vxpose.xlu0.b32.cont [3/16] %v245, 128
        %878 = vxpose.xlu0.b32.cont [4/16] %v249, 128
        %879 = vxpose.xlu0.b32.cont [5/16] %v253, 128
        %880 = vxpose.xlu0.b32.cont [6/16] %v257, 128
        %881 = vxpose.xlu0.b32.cont [7/16] %v261, 128
        %882 = vxpose.xlu0.b32.cont [8/16] %v265, 128
        %883 = vxpose.xlu0.b32.cont [9/16] %v269, 128
        %884 = vxpose.xlu0.b32.cont [10/16] %v273, 128
        %885 = vxpose.xlu0.b32.cont [11/16] %v277, 128
        %886 = vxpose.xlu0.b32.cont [12/16] %v281, 128
        %887 = vxpose.xlu0.b32.cont [13/16] %v285, 128
        %888 = vxpose.xlu0.b32.cont [14/16] %v289, 128
        %889 = vxpose.xlu0.b32.cont [15/16] %v293, 128
        %890 = vxpose.xlu0.b32.end [16/16] %v297, 128
        %v891 = vpop.trf.xlu0
        %v892 = vpop.trf.xlu0
        %v893 = vpop.trf.xlu0
        %v894 = vpop.trf.xlu0
        %v895 = vpop.trf.xlu0
        %v896 = vpop.trf.xlu0
        %v897 = vpop.trf.xlu0
        %v898 = vpop.trf.xlu0
        %v899 = vpop.trf.xlu0
        %v900 = vpop.trf.xlu0
        %v901 = vpop.trf.xlu0
        %v902 = vpop.trf.xlu0
        %v903 = vpop.trf.xlu0
        %v904 = vpop.trf.xlu0
        %v905 = vpop.trf.xlu0
        %v906 = vpop.trf.xlu0
        %907 = vxpose.xlu0.b32.start [1/16] %v238, 128
        %908 = vxpose.xlu0.b32.cont [2/16] %v242, 128
        %909 = vxpose.xlu0.b32.cont [3/16] %v246, 128
        %910 = vxpose.xlu0.b32.cont [4/16] %v250, 128
        %911 = vxpose.xlu0.b32.cont [5/16] %v254, 128
        %912 = vxpose.xlu0.b32.cont [6/16] %v258, 128
        %913 = vxpose.xlu0.b32.cont [7/16] %v262, 128
        %914 = vxpose.xlu0.b32.cont [8/16] %v266, 128
        %915 = vxpose.xlu0.b32.cont [9/16] %v270, 128
        %916 = vxpose.xlu0.b32.cont [10/16] %v274, 128
        %917 = vxpose.xlu0.b32.cont [11/16] %v278, 128
        %918 = vxpose.xlu0.b32.cont [12/16] %v282, 128
        %919 = vxpose.xlu0.b32.cont [13/16] %v286, 128
        %920 = vxpose.xlu0.b32.cont [14/16] %v290, 128
        %921 = vxpose.xlu0.b32.cont [15/16] %v294, 128
        %922 = vxpose.xlu0.b32.end [16/16] %v298, 128
        %v923 = vpop.trf.xlu0
        %v924 = vpop.trf.xlu0
        %v925 = vpop.trf.xlu0
        %v926 = vpop.trf.xlu0
        %v927 = vpop.trf.xlu0
        %v928 = vpop.trf.xlu0
        %v929 = vpop.trf.xlu0
        %v930 = vpop.trf.xlu0
        %v931 = vpop.trf.xlu0
        %v932 = vpop.trf.xlu0
        %v933 = vpop.trf.xlu0
        %v934 = vpop.trf.xlu0
        %v935 = vpop.trf.xlu0
        %v936 = vpop.trf.xlu0
        %v937 = vpop.trf.xlu0
        %v938 = vpop.trf.xlu0
        %939 = vxpose.xlu0.b32.start [1/16] %v299, 128
        %940 = vxpose.xlu0.b32.cont [2/16] %v303, 128
        %941 = vxpose.xlu0.b32.cont [3/16] %v307, 128
        %942 = vxpose.xlu0.b32.cont [4/16] %v311, 128
        %943 = vxpose.xlu0.b32.cont [5/16] %v315, 128
        %944 = vxpose.xlu0.b32.cont [6/16] %v319, 128
        %945 = vxpose.xlu0.b32.cont [7/16] %v323, 128
        %946 = vxpose.xlu0.b32.cont [8/16] %v327, 128
        %947 = vxpose.xlu0.b32.cont [9/16] %v331, 128
        %948 = vxpose.xlu0.b32.cont [10/16] %v335, 128
        %949 = vxpose.xlu0.b32.cont [11/16] %v339, 128
        %950 = vxpose.xlu0.b32.cont [12/16] %v343, 128
        %951 = vxpose.xlu0.b32.cont [13/16] %v347, 128
        %952 = vxpose.xlu0.b32.cont [14/16] %v351, 128
        %953 = vxpose.xlu0.b32.cont [15/16] %v355, 128
        %954 = vxpose.xlu0.b32.end [16/16] %v359, 128
        %v955 = vpop.trf.xlu0
        %v956 = vpop.trf.xlu0
        %v957 = vpop.trf.xlu0
        %v958 = vpop.trf.xlu0
        %v959 = vpop.trf.xlu0
        %v960 = vpop.trf.xlu0
        %v961 = vpop.trf.xlu0
        %v962 = vpop.trf.xlu0
        %v963 = vpop.trf.xlu0
        %v964 = vpop.trf.xlu0
        %v965 = vpop.trf.xlu0
        %v966 = vpop.trf.xlu0
        %v967 = vpop.trf.xlu0
        %v968 = vpop.trf.xlu0
        %v969 = vpop.trf.xlu0
        %v970 = vpop.trf.xlu0
        %971 = vxpose.xlu0.b32.start [1/16] %v300, 128
        %972 = vxpose.xlu0.b32.cont [2/16] %v304, 128
        %973 = vxpose.xlu0.b32.cont [3/16] %v308, 128
        %974 = vxpose.xlu0.b32.cont [4/16] %v312, 128
        %975 = vxpose.xlu0.b32.cont [5/16] %v316, 128
        %976 = vxpose.xlu0.b32.cont [6/16] %v320, 128
        %977 = vxpose.xlu0.b32.cont [7/16] %v324, 128
        %978 = vxpose.xlu0.b32.cont [8/16] %v328, 128
        %979 = vxpose.xlu0.b32.cont [9/16] %v332, 128
        %980 = vxpose.xlu0.b32.cont [10/16] %v336, 128
        %981 = vxpose.xlu0.b32.cont [11/16] %v340, 128
        %982 = vxpose.xlu0.b32.cont [12/16] %v344, 128
        %983 = vxpose.xlu0.b32.cont [13/16] %v348, 128
        %984 = vxpose.xlu0.b32.cont [14/16] %v352, 128
        %985 = vxpose.xlu0.b32.cont [15/16] %v356, 128
        %986 = vxpose.xlu0.b32.end [16/16] %v360, 128
        %v987 = vpop.trf.xlu0
        %v988 = vpop.trf.xlu0
        %v989 = vpop.trf.xlu0
        %v990 = vpop.trf.xlu0
        %v991 = vpop.trf.xlu0
        %v992 = vpop.trf.xlu0
        %v993 = vpop.trf.xlu0
        %v994 = vpop.trf.xlu0
        %v995 = vpop.trf.xlu0
        %v996 = vpop.trf.xlu0
        %v997 = vpop.trf.xlu0
        %v998 = vpop.trf.xlu0
        %v999 = vpop.trf.xlu0
        %v1000 = vpop.trf.xlu0
        %v1001 = vpop.trf.xlu0
        %v1002 = vpop.trf.xlu0
        %1003 = vxpose.xlu0.b32.start [1/16] %v301, 128
        %1004 = vxpose.xlu0.b32.cont [2/16] %v305, 128
        %1005 = vxpose.xlu0.b32.cont [3/16] %v309, 128
        %1006 = vxpose.xlu0.b32.cont [4/16] %v313, 128
        %1007 = vxpose.xlu0.b32.cont [5/16] %v317, 128
        %1008 = vxpose.xlu0.b32.cont [6/16] %v321, 128
        %1009 = vxpose.xlu0.b32.cont [7/16] %v325, 128
        %1010 = vxpose.xlu0.b32.cont [8/16] %v329, 128
        %1011 = vxpose.xlu0.b32.cont [9/16] %v333, 128
        %1012 = vxpose.xlu0.b32.cont [10/16] %v337, 128
        %1013 = vxpose.xlu0.b32.cont [11/16] %v341, 128
        %1014 = vxpose.xlu0.b32.cont [12/16] %v345, 128
        %1015 = vxpose.xlu0.b32.cont [13/16] %v349, 128
        %1016 = vxpose.xlu0.b32.cont [14/16] %v353, 128
        %1017 = vxpose.xlu0.b32.cont [15/16] %v357, 128
        %1018 = vxpose.xlu0.b32.end [16/16] %v361, 128
        %v1019 = vpop.trf.xlu0
        %v1020 = vpop.trf.xlu0
        %v1021 = vpop.trf.xlu0
        %v1022 = vpop.trf.xlu0
        %v1023 = vpop.trf.xlu0
        %v1024 = vpop.trf.xlu0
        %v1025 = vpop.trf.xlu0
        %v1026 = vpop.trf.xlu0
        %v1027 = vpop.trf.xlu0
        %v1028 = vpop.trf.xlu0
        %v1029 = vpop.trf.xlu0
        %v1030 = vpop.trf.xlu0
        %v1031 = vpop.trf.xlu0
        %v1032 = vpop.trf.xlu0
        %v1033 = vpop.trf.xlu0
        %v1034 = vpop.trf.xlu0
        %1035 = vxpose.xlu0.b32.start [1/16] %v302, 128
        %1036 = vxpose.xlu0.b32.cont [2/16] %v306, 128
        %1037 = vxpose.xlu0.b32.cont [3/16] %v310, 128
        %1038 = vxpose.xlu0.b32.cont [4/16] %v314, 128
        %1039 = vxpose.xlu0.b32.cont [5/16] %v318, 128
        %1040 = vxpose.xlu0.b32.cont [6/16] %v322, 128
        %1041 = vxpose.xlu0.b32.cont [7/16] %v326, 128
        %1042 = vxpose.xlu0.b32.cont [8/16] %v330, 128
        %1043 = vxpose.xlu0.b32.cont [9/16] %v334, 128
        %1044 = vxpose.xlu0.b32.cont [10/16] %v338, 128
        %1045 = vxpose.xlu0.b32.cont [11/16] %v342, 128
        %1046 = vxpose.xlu0.b32.cont [12/16] %v346, 128
        %1047 = vxpose.xlu0.b32.cont [13/16] %v350, 128
        %1048 = vxpose.xlu0.b32.cont [14/16] %v354, 128
        %1049 = vxpose.xlu0.b32.cont [15/16] %v358, 128
        %1050 = vxpose.xlu0.b32.end [16/16] %v362, 128
        %v1051 = vpop.trf.xlu0
        %v1052 = vpop.trf.xlu0
        %v1053 = vpop.trf.xlu0
        %v1054 = vpop.trf.xlu0
        %v1055 = vpop.trf.xlu0
        %v1056 = vpop.trf.xlu0
        %v1057 = vpop.trf.xlu0
        %v1058 = vpop.trf.xlu0
        %v1059 = vpop.trf.xlu0
        %v1060 = vpop.trf.xlu0
        %v1061 = vpop.trf.xlu0
        %v1062 = vpop.trf.xlu0
        %v1063 = vpop.trf.xlu0
        %v1064 = vpop.trf.xlu0
        %v1065 = vpop.trf.xlu0
        %v1066 = vpop.trf.xlu0
        %1067 = vxpose.xlu0.b32.start [1/16] %v363, 128
        %1068 = vxpose.xlu0.b32.cont [2/16] %v367, 128
        %1069 = vxpose.xlu0.b32.cont [3/16] %v371, 128
        %1070 = vxpose.xlu0.b32.cont [4/16] %v375, 128
        %1071 = vxpose.xlu0.b32.cont [5/16] %v379, 128
        %1072 = vxpose.xlu0.b32.cont [6/16] %v383, 128
        %1073 = vxpose.xlu0.b32.cont [7/16] %v387, 128
        %1074 = vxpose.xlu0.b32.cont [8/16] %v391, 128
        %1075 = vxpose.xlu0.b32.cont [9/16] %v395, 128
        %1076 = vxpose.xlu0.b32.cont [10/16] %v399, 128
        %1077 = vxpose.xlu0.b32.cont [11/16] %v403, 128
        %1078 = vxpose.xlu0.b32.cont [12/16] %v407, 128
        %1079 = vxpose.xlu0.b32.cont [13/16] %v411, 128
        %1080 = vxpose.xlu0.b32.cont [14/16] %v415, 128
        %1081 = vxpose.xlu0.b32.cont [15/16] %v419, 128
        %1082 = vxpose.xlu0.b32.end [16/16] %v423, 128
        %v1083 = vpop.trf.xlu0
        %v1084 = vpop.trf.xlu0
        %v1085 = vpop.trf.xlu0
        %v1086 = vpop.trf.xlu0
        %v1087 = vpop.trf.xlu0
        %v1088 = vpop.trf.xlu0
        %v1089 = vpop.trf.xlu0
        %v1090 = vpop.trf.xlu0
        %v1091 = vpop.trf.xlu0
        %v1092 = vpop.trf.xlu0
        %v1093 = vpop.trf.xlu0
        %v1094 = vpop.trf.xlu0
        %v1095 = vpop.trf.xlu0
        %v1096 = vpop.trf.xlu0
        %v1097 = vpop.trf.xlu0
        %v1098 = vpop.trf.xlu0
        %1099 = vxpose.xlu0.b32.start [1/16] %v364, 128
        %1100 = vxpose.xlu0.b32.cont [2/16] %v368, 128
        %1101 = vxpose.xlu0.b32.cont [3/16] %v372, 128
        %1102 = vxpose.xlu0.b32.cont [4/16] %v376, 128
        %1103 = vxpose.xlu0.b32.cont [5/16] %v380, 128
        %1104 = vxpose.xlu0.b32.cont [6/16] %v384, 128
        %1105 = vxpose.xlu0.b32.cont [7/16] %v388, 128
        %1106 = vxpose.xlu0.b32.cont [8/16] %v392, 128
        %1107 = vxpose.xlu0.b32.cont [9/16] %v396, 128
        %1108 = vxpose.xlu0.b32.cont [10/16] %v400, 128
        %1109 = vxpose.xlu0.b32.cont [11/16] %v404, 128
        %1110 = vxpose.xlu0.b32.cont [12/16] %v408, 128
        %1111 = vxpose.xlu0.b32.cont [13/16] %v412, 128
        %1112 = vxpose.xlu0.b32.cont [14/16] %v416, 128
        %1113 = vxpose.xlu0.b32.cont [15/16] %v420, 128
        %1114 = vxpose.xlu0.b32.end [16/16] %v424, 128
        %v1115 = vpop.trf.xlu0
        %v1116 = vpop.trf.xlu0
        %v1117 = vpop.trf.xlu0
        %v1118 = vpop.trf.xlu0
        %v1119 = vpop.trf.xlu0
        %v1120 = vpop.trf.xlu0
        %v1121 = vpop.trf.xlu0
        %v1122 = vpop.trf.xlu0
        %v1123 = vpop.trf.xlu0
        %v1124 = vpop.trf.xlu0
        %v1125 = vpop.trf.xlu0
        %v1126 = vpop.trf.xlu0
        %v1127 = vpop.trf.xlu0
        %v1128 = vpop.trf.xlu0
        %v1129 = vpop.trf.xlu0
        %v1130 = vpop.trf.xlu0
        %1131 = vxpose.xlu0.b32.start [1/16] %v365, 128
        %1132 = vxpose.xlu0.b32.cont [2/16] %v369, 128
        %1133 = vxpose.xlu0.b32.cont [3/16] %v373, 128
        %1134 = vxpose.xlu0.b32.cont [4/16] %v377, 128
        %1135 = vxpose.xlu0.b32.cont [5/16] %v381, 128
        %1136 = vxpose.xlu0.b32.cont [6/16] %v385, 128
        %1137 = vxpose.xlu0.b32.cont [7/16] %v389, 128
        %1138 = vxpose.xlu0.b32.cont [8/16] %v393, 128
        %1139 = vxpose.xlu0.b32.cont [9/16] %v397, 128
        %1140 = vxpose.xlu0.b32.cont [10/16] %v401, 128
        %1141 = vxpose.xlu0.b32.cont [11/16] %v405, 128
        %1142 = vxpose.xlu0.b32.cont [12/16] %v409, 128
        %1143 = vxpose.xlu0.b32.cont [13/16] %v413, 128
        %1144 = vxpose.xlu0.b32.cont [14/16] %v417, 128
        %1145 = vxpose.xlu0.b32.cont [15/16] %v421, 128
        %1146 = vxpose.xlu0.b32.end [16/16] %v425, 128
        %v1147 = vpop.trf.xlu0
        %v1148 = vpop.trf.xlu0
        %v1149 = vpop.trf.xlu0
        %v1150 = vpop.trf.xlu0
        %v1151 = vpop.trf.xlu0
        %v1152 = vpop.trf.xlu0
        %v1153 = vpop.trf.xlu0
        %v1154 = vpop.trf.xlu0
        %v1155 = vpop.trf.xlu0
        %v1156 = vpop.trf.xlu0
        %v1157 = vpop.trf.xlu0
        %v1158 = vpop.trf.xlu0
        %v1159 = vpop.trf.xlu0
        %v1160 = vpop.trf.xlu0
        %v1161 = vpop.trf.xlu0
        %v1162 = vpop.trf.xlu0
        %1163 = vxpose.xlu0.b32.start [1/16] %v366, 128
        %1164 = vxpose.xlu0.b32.cont [2/16] %v370, 128
        %1165 = vxpose.xlu0.b32.cont [3/16] %v374, 128
        %1166 = vxpose.xlu0.b32.cont [4/16] %v378, 128
        %1167 = vxpose.xlu0.b32.cont [5/16] %v382, 128
        %1168 = vxpose.xlu0.b32.cont [6/16] %v386, 128
        %1169 = vxpose.xlu0.b32.cont [7/16] %v390, 128
        %1170 = vxpose.xlu0.b32.cont [8/16] %v394, 128
        %1171 = vxpose.xlu0.b32.cont [9/16] %v398, 128
        %1172 = vxpose.xlu0.b32.cont [10/16] %v402, 128
        %1173 = vxpose.xlu0.b32.cont [11/16] %v406, 128
        %1174 = vxpose.xlu0.b32.cont [12/16] %v410, 128
        %1175 = vxpose.xlu0.b32.cont [13/16] %v414, 128
        %1176 = vxpose.xlu0.b32.cont [14/16] %v418, 128
        %1177 = vxpose.xlu0.b32.cont [15/16] %v422, 128
        %1178 = vxpose.xlu0.b32.end [16/16] %v426, 128
        %v1179 = vpop.trf.xlu0
        %v1180 = vpop.trf.xlu0
        %v1181 = vpop.trf.xlu0
        %v1182 = vpop.trf.xlu0
        %v1183 = vpop.trf.xlu0
        %v1184 = vpop.trf.xlu0
        %v1185 = vpop.trf.xlu0
        %v1186 = vpop.trf.xlu0
        %v1187 = vpop.trf.xlu0
        %v1188 = vpop.trf.xlu0
        %v1189 = vpop.trf.xlu0
        %v1190 = vpop.trf.xlu0
        %v1191 = vpop.trf.xlu0
        %v1192 = vpop.trf.xlu0
        %v1193 = vpop.trf.xlu0
        %v1194 = vpop.trf.xlu0
        %1195 = vxpose.xlu0.b32.start [1/16] %v427, 128
        %1196 = vxpose.xlu0.b32.cont [2/16] %v431, 128
        %1197 = vxpose.xlu0.b32.cont [3/16] %v435, 128
        %1198 = vxpose.xlu0.b32.cont [4/16] %v439, 128
        %1199 = vxpose.xlu0.b32.cont [5/16] %v443, 128
        %1200 = vxpose.xlu0.b32.cont [6/16] %v447, 128
        %1201 = vxpose.xlu0.b32.cont [7/16] %v451, 128
        %1202 = vxpose.xlu0.b32.cont [8/16] %v455, 128
        %1203 = vxpose.xlu0.b32.cont [9/16] %v459, 128
        %1204 = vxpose.xlu0.b32.cont [10/16] %v463, 128
        %1205 = vxpose.xlu0.b32.cont [11/16] %v467, 128
        %1206 = vxpose.xlu0.b32.cont [12/16] %v471, 128
        %1207 = vxpose.xlu0.b32.cont [13/16] %v475, 128
        %1208 = vxpose.xlu0.b32.cont [14/16] %v479, 128
        %1209 = vxpose.xlu0.b32.cont [15/16] %v483, 128
        %1210 = vxpose.xlu0.b32.end [16/16] %v487, 128
        %v1211 = vpop.trf.xlu0
        %v1212 = vpop.trf.xlu0
        %v1213 = vpop.trf.xlu0
        %v1214 = vpop.trf.xlu0
        %v1215 = vpop.trf.xlu0
        %v1216 = vpop.trf.xlu0
        %v1217 = vpop.trf.xlu0
        %v1218 = vpop.trf.xlu0
        %v1219 = vpop.trf.xlu0
        %v1220 = vpop.trf.xlu0
        %v1221 = vpop.trf.xlu0
        %v1222 = vpop.trf.xlu0
        %v1223 = vpop.trf.xlu0
        %v1224 = vpop.trf.xlu0
        %v1225 = vpop.trf.xlu0
        %v1226 = vpop.trf.xlu0
        %1227 = vxpose.xlu0.b32.start [1/16] %v428, 128
        %1228 = vxpose.xlu0.b32.cont [2/16] %v432, 128
        %1229 = vxpose.xlu0.b32.cont [3/16] %v436, 128
        %1230 = vxpose.xlu0.b32.cont [4/16] %v440, 128
        %1231 = vxpose.xlu0.b32.cont [5/16] %v444, 128
        %1232 = vxpose.xlu0.b32.cont [6/16] %v448, 128
        %1233 = vxpose.xlu0.b32.cont [7/16] %v452, 128
        %1234 = vxpose.xlu0.b32.cont [8/16] %v456, 128
        %1235 = vxpose.xlu0.b32.cont [9/16] %v460, 128
        %1236 = vxpose.xlu0.b32.cont [10/16] %v464, 128
        %1237 = vxpose.xlu0.b32.cont [11/16] %v468, 128
        %1238 = vxpose.xlu0.b32.cont [12/16] %v472, 128
        %1239 = vxpose.xlu0.b32.cont [13/16] %v476, 128
        %1240 = vxpose.xlu0.b32.cont [14/16] %v480, 128
        %1241 = vxpose.xlu0.b32.cont [15/16] %v484, 128
        %1242 = vxpose.xlu0.b32.end [16/16] %v488, 128
        %v1243 = vpop.trf.xlu0
        %v1244 = vpop.trf.xlu0
        %v1245 = vpop.trf.xlu0
        %v1246 = vpop.trf.xlu0
        %v1247 = vpop.trf.xlu0
        %v1248 = vpop.trf.xlu0
        %v1249 = vpop.trf.xlu0
        %v1250 = vpop.trf.xlu0
        %v1251 = vpop.trf.xlu0
        %v1252 = vpop.trf.xlu0
        %v1253 = vpop.trf.xlu0
        %v1254 = vpop.trf.xlu0
        %v1255 = vpop.trf.xlu0
        %v1256 = vpop.trf.xlu0
        %v1257 = vpop.trf.xlu0
        %v1258 = vpop.trf.xlu0
        %1259 = vxpose.xlu0.b32.start [1/16] %v429, 128
        %1260 = vxpose.xlu0.b32.cont [2/16] %v433, 128
        %1261 = vxpose.xlu0.b32.cont [3/16] %v437, 128
        %1262 = vxpose.xlu0.b32.cont [4/16] %v441, 128
        %1263 = vxpose.xlu0.b32.cont [5/16] %v445, 128
        %1264 = vxpose.xlu0.b32.cont [6/16] %v449, 128
        %1265 = vxpose.xlu0.b32.cont [7/16] %v453, 128
        %1266 = vxpose.xlu0.b32.cont [8/16] %v457, 128
        %1267 = vxpose.xlu0.b32.cont [9/16] %v461, 128
        %1268 = vxpose.xlu0.b32.cont [10/16] %v465, 128
        %1269 = vxpose.xlu0.b32.cont [11/16] %v469, 128
        %1270 = vxpose.xlu0.b32.cont [12/16] %v473, 128
        %1271 = vxpose.xlu0.b32.cont [13/16] %v477, 128
        %1272 = vxpose.xlu0.b32.cont [14/16] %v481, 128
        %1273 = vxpose.xlu0.b32.cont [15/16] %v485, 128
        %1274 = vxpose.xlu0.b32.end [16/16] %v489, 128
        %v1275 = vpop.trf.xlu0
        %v1276 = vpop.trf.xlu0
        %v1277 = vpop.trf.xlu0
        %v1278 = vpop.trf.xlu0
        %v1279 = vpop.trf.xlu0
        %v1280 = vpop.trf.xlu0
        %v1281 = vpop.trf.xlu0
        %v1282 = vpop.trf.xlu0
        %v1283 = vpop.trf.xlu0
        %v1284 = vpop.trf.xlu0
        %v1285 = vpop.trf.xlu0
        %v1286 = vpop.trf.xlu0
        %v1287 = vpop.trf.xlu0
        %v1288 = vpop.trf.xlu0
        %v1289 = vpop.trf.xlu0
        %v1290 = vpop.trf.xlu0
        %1291 = vxpose.xlu0.b32.start [1/16] %v430, 128
        %1292 = vxpose.xlu0.b32.cont [2/16] %v434, 128
        %1293 = vxpose.xlu0.b32.cont [3/16] %v438, 128
        %1294 = vxpose.xlu0.b32.cont [4/16] %v442, 128
        %1295 = vxpose.xlu0.b32.cont [5/16] %v446, 128
        %1296 = vxpose.xlu0.b32.cont [6/16] %v450, 128
        %1297 = vxpose.xlu0.b32.cont [7/16] %v454, 128
        %1298 = vxpose.xlu0.b32.cont [8/16] %v458, 128
        %1299 = vxpose.xlu0.b32.cont [9/16] %v462, 128
        %1300 = vxpose.xlu0.b32.cont [10/16] %v466, 128
        %1301 = vxpose.xlu0.b32.cont [11/16] %v470, 128
        %1302 = vxpose.xlu0.b32.cont [12/16] %v474, 128
        %1303 = vxpose.xlu0.b32.cont [13/16] %v478, 128
        %1304 = vxpose.xlu0.b32.cont [14/16] %v482, 128
        %1305 = vxpose.xlu0.b32.cont [15/16] %v486, 128
        %1306 = vxpose.xlu0.b32.end [16/16] %v490, 128
        %v1307 = vpop.trf.xlu0
        %v1308 = vpop.trf.xlu0
        %v1309 = vpop.trf.xlu0
        %v1310 = vpop.trf.xlu0
        %v1311 = vpop.trf.xlu0
        %v1312 = vpop.trf.xlu0
        %v1313 = vpop.trf.xlu0
        %v1314 = vpop.trf.xlu0
        %v1315 = vpop.trf.xlu0
        %v1316 = vpop.trf.xlu0
        %v1317 = vpop.trf.xlu0
        %v1318 = vpop.trf.xlu0
        %v1319 = vpop.trf.xlu0
        %v1320 = vpop.trf.xlu0
        %v1321 = vpop.trf.xlu0
        %v1322 = vpop.trf.xlu0
        %1323 = vxpose.xlu0.b32.start [1/16] %v491, 128
        %1324 = vxpose.xlu0.b32.cont [2/16] %v495, 128
        %1325 = vxpose.xlu0.b32.cont [3/16] %v499, 128
        %1326 = vxpose.xlu0.b32.cont [4/16] %v503, 128
        %1327 = vxpose.xlu0.b32.cont [5/16] %v507, 128
        %1328 = vxpose.xlu0.b32.cont [6/16] %v511, 128
        %1329 = vxpose.xlu0.b32.cont [7/16] %v515, 128
        %1330 = vxpose.xlu0.b32.cont [8/16] %v519, 128
        %1331 = vxpose.xlu0.b32.cont [9/16] %v523, 128
        %1332 = vxpose.xlu0.b32.cont [10/16] %v527, 128
        %1333 = vxpose.xlu0.b32.cont [11/16] %v531, 128
        %1334 = vxpose.xlu0.b32.cont [12/16] %v535, 128
        %1335 = vxpose.xlu0.b32.cont [13/16] %v539, 128
        %1336 = vxpose.xlu0.b32.cont [14/16] %v543, 128
        %1337 = vxpose.xlu0.b32.cont [15/16] %v547, 128
        %1338 = vxpose.xlu0.b32.end [16/16] %v551, 128
        %v1339 = vpop.trf.xlu0
        %v1340 = vpop.trf.xlu0
        %v1341 = vpop.trf.xlu0
        %v1342 = vpop.trf.xlu0
        %v1343 = vpop.trf.xlu0
        %v1344 = vpop.trf.xlu0
        %v1345 = vpop.trf.xlu0
        %v1346 = vpop.trf.xlu0
        %v1347 = vpop.trf.xlu0
        %v1348 = vpop.trf.xlu0
        %v1349 = vpop.trf.xlu0
        %v1350 = vpop.trf.xlu0
        %v1351 = vpop.trf.xlu0
        %v1352 = vpop.trf.xlu0
        %v1353 = vpop.trf.xlu0
        %v1354 = vpop.trf.xlu0
        %1355 = vxpose.xlu0.b32.start [1/16] %v492, 128
        %1356 = vxpose.xlu0.b32.cont [2/16] %v496, 128
        %1357 = vxpose.xlu0.b32.cont [3/16] %v500, 128
        %1358 = vxpose.xlu0.b32.cont [4/16] %v504, 128
        %1359 = vxpose.xlu0.b32.cont [5/16] %v508, 128
        %1360 = vxpose.xlu0.b32.cont [6/16] %v512, 128
        %1361 = vxpose.xlu0.b32.cont [7/16] %v516, 128
        %1362 = vxpose.xlu0.b32.cont [8/16] %v520, 128
        %1363 = vxpose.xlu0.b32.cont [9/16] %v524, 128
        %1364 = vxpose.xlu0.b32.cont [10/16] %v528, 128
        %1365 = vxpose.xlu0.b32.cont [11/16] %v532, 128
        %1366 = vxpose.xlu0.b32.cont [12/16] %v536, 128
        %1367 = vxpose.xlu0.b32.cont [13/16] %v540, 128
        %1368 = vxpose.xlu0.b32.cont [14/16] %v544, 128
        %1369 = vxpose.xlu0.b32.cont [15/16] %v548, 128
        %1370 = vxpose.xlu0.b32.end [16/16] %v552, 128
        %v1371 = vpop.trf.xlu0
        %v1372 = vpop.trf.xlu0
        %v1373 = vpop.trf.xlu0
        %v1374 = vpop.trf.xlu0
        %v1375 = vpop.trf.xlu0
        %v1376 = vpop.trf.xlu0
        %v1377 = vpop.trf.xlu0
        %v1378 = vpop.trf.xlu0
        %v1379 = vpop.trf.xlu0
        %v1380 = vpop.trf.xlu0
        %v1381 = vpop.trf.xlu0
        %v1382 = vpop.trf.xlu0
        %v1383 = vpop.trf.xlu0
        %v1384 = vpop.trf.xlu0
        %v1385 = vpop.trf.xlu0
        %v1386 = vpop.trf.xlu0
        %1387 = vxpose.xlu0.b32.start [1/16] %v493, 128
        %1388 = vxpose.xlu0.b32.cont [2/16] %v497, 128
        %1389 = vxpose.xlu0.b32.cont [3/16] %v501, 128
        %1390 = vxpose.xlu0.b32.cont [4/16] %v505, 128
        %1391 = vxpose.xlu0.b32.cont [5/16] %v509, 128
        %1392 = vxpose.xlu0.b32.cont [6/16] %v513, 128
        %1393 = vxpose.xlu0.b32.cont [7/16] %v517, 128
        %1394 = vxpose.xlu0.b32.cont [8/16] %v521, 128
        %1395 = vxpose.xlu0.b32.cont [9/16] %v525, 128
        %1396 = vxpose.xlu0.b32.cont [10/16] %v529, 128
        %1397 = vxpose.xlu0.b32.cont [11/16] %v533, 128
        %1398 = vxpose.xlu0.b32.cont [12/16] %v537, 128
        %1399 = vxpose.xlu0.b32.cont [13/16] %v541, 128
        %1400 = vxpose.xlu0.b32.cont [14/16] %v545, 128
        %1401 = vxpose.xlu0.b32.cont [15/16] %v549, 128
        %1402 = vxpose.xlu0.b32.end [16/16] %v553, 128
        %v1403 = vpop.trf.xlu0
        %v1404 = vpop.trf.xlu0
        %v1405 = vpop.trf.xlu0
        %v1406 = vpop.trf.xlu0
        %v1407 = vpop.trf.xlu0
        %v1408 = vpop.trf.xlu0
        %v1409 = vpop.trf.xlu0
        %v1410 = vpop.trf.xlu0
        %v1411 = vpop.trf.xlu0
        %v1412 = vpop.trf.xlu0
        %v1413 = vpop.trf.xlu0
        %v1414 = vpop.trf.xlu0
        %v1415 = vpop.trf.xlu0
        %v1416 = vpop.trf.xlu0
        %v1417 = vpop.trf.xlu0
        %v1418 = vpop.trf.xlu0
        %1419 = vxpose.xlu0.b32.start [1/16] %v494, 128
        %1420 = vxpose.xlu0.b32.cont [2/16] %v498, 128
        %1421 = vxpose.xlu0.b32.cont [3/16] %v502, 128
        %1422 = vxpose.xlu0.b32.cont [4/16] %v506, 128
        %1423 = vxpose.xlu0.b32.cont [5/16] %v510, 128
        %1424 = vxpose.xlu0.b32.cont [6/16] %v514, 128
        %1425 = vxpose.xlu0.b32.cont [7/16] %v518, 128
        %1426 = vxpose.xlu0.b32.cont [8/16] %v522, 128
        %1427 = vxpose.xlu0.b32.cont [9/16] %v526, 128
        %1428 = vxpose.xlu0.b32.cont [10/16] %v530, 128
        %1429 = vxpose.xlu0.b32.cont [11/16] %v534, 128
        %1430 = vxpose.xlu0.b32.cont [12/16] %v538, 128
        %1431 = vxpose.xlu0.b32.cont [13/16] %v542, 128
        %1432 = vxpose.xlu0.b32.cont [14/16] %v546, 128
        %1433 = vxpose.xlu0.b32.cont [15/16] %v550, 128
        %1434 = vxpose.xlu0.b32.end [16/16] %v554, 128
        %v1435 = vpop.trf.xlu0
        %v1436 = vpop.trf.xlu0
        %v1437 = vpop.trf.xlu0
        %v1438 = vpop.trf.xlu0
        %v1439 = vpop.trf.xlu0
        %v1440 = vpop.trf.xlu0
        %v1441 = vpop.trf.xlu0
        %v1442 = vpop.trf.xlu0
        %v1443 = vpop.trf.xlu0
        %v1444 = vpop.trf.xlu0
        %v1445 = vpop.trf.xlu0
        %v1446 = vpop.trf.xlu0
        %v1447 = vpop.trf.xlu0
        %v1448 = vpop.trf.xlu0
        %v1449 = vpop.trf.xlu0
        %v1450 = vpop.trf.xlu0
        %1451 = vxpose.xlu0.b32.start [1/16] %v555, 128
        %1452 = vxpose.xlu0.b32.cont [2/16] %v559, 128
        %1453 = vxpose.xlu0.b32.cont [3/16] %v563, 128
        %1454 = vxpose.xlu0.b32.cont [4/16] %v567, 128
        %1455 = vxpose.xlu0.b32.cont [5/16] %v571, 128
        %1456 = vxpose.xlu0.b32.cont [6/16] %v575, 128
        %1457 = vxpose.xlu0.b32.cont [7/16] %v579, 128
        %1458 = vxpose.xlu0.b32.cont [8/16] %v583, 128
        %1459 = vxpose.xlu0.b32.cont [9/16] %v587, 128
        %1460 = vxpose.xlu0.b32.cont [10/16] %v591, 128
        %1461 = vxpose.xlu0.b32.cont [11/16] %v595, 128
        %1462 = vxpose.xlu0.b32.cont [12/16] %v599, 128
        %1463 = vxpose.xlu0.b32.cont [13/16] %v603, 128
        %1464 = vxpose.xlu0.b32.cont [14/16] %v607, 128
        %1465 = vxpose.xlu0.b32.cont [15/16] %v611, 128
        %1466 = vxpose.xlu0.b32.end [16/16] %v615, 128
        %v1467 = vpop.trf.xlu0
        %v1468 = vpop.trf.xlu0
        %v1469 = vpop.trf.xlu0
        %v1470 = vpop.trf.xlu0
        %v1471 = vpop.trf.xlu0
        %v1472 = vpop.trf.xlu0
        %v1473 = vpop.trf.xlu0
        %v1474 = vpop.trf.xlu0
        %v1475 = vpop.trf.xlu0
        %v1476 = vpop.trf.xlu0
        %v1477 = vpop.trf.xlu0
        %v1478 = vpop.trf.xlu0
        %v1479 = vpop.trf.xlu0
        %v1480 = vpop.trf.xlu0
        %v1481 = vpop.trf.xlu0
        %v1482 = vpop.trf.xlu0
        %1483 = vxpose.xlu0.b32.start [1/16] %v556, 128
        %1484 = vxpose.xlu0.b32.cont [2/16] %v560, 128
        %1485 = vxpose.xlu0.b32.cont [3/16] %v564, 128
        %1486 = vxpose.xlu0.b32.cont [4/16] %v568, 128
        %1487 = vxpose.xlu0.b32.cont [5/16] %v572, 128
        %1488 = vxpose.xlu0.b32.cont [6/16] %v576, 128
        %1489 = vxpose.xlu0.b32.cont [7/16] %v580, 128
        %1490 = vxpose.xlu0.b32.cont [8/16] %v584, 128
        %1491 = vxpose.xlu0.b32.cont [9/16] %v588, 128
        %1492 = vxpose.xlu0.b32.cont [10/16] %v592, 128
        %1493 = vxpose.xlu0.b32.cont [11/16] %v596, 128
        %1494 = vxpose.xlu0.b32.cont [12/16] %v600, 128
        %1495 = vxpose.xlu0.b32.cont [13/16] %v604, 128
        %1496 = vxpose.xlu0.b32.cont [14/16] %v608, 128
        %1497 = vxpose.xlu0.b32.cont [15/16] %v612, 128
        %1498 = vxpose.xlu0.b32.end [16/16] %v616, 128
        %v1499 = vpop.trf.xlu0
        %v1500 = vpop.trf.xlu0
        %v1501 = vpop.trf.xlu0
        %v1502 = vpop.trf.xlu0
        %v1503 = vpop.trf.xlu0
        %v1504 = vpop.trf.xlu0
        %v1505 = vpop.trf.xlu0
        %v1506 = vpop.trf.xlu0
        %v1507 = vpop.trf.xlu0
        %v1508 = vpop.trf.xlu0
        %v1509 = vpop.trf.xlu0
        %v1510 = vpop.trf.xlu0
        %v1511 = vpop.trf.xlu0
        %v1512 = vpop.trf.xlu0
        %v1513 = vpop.trf.xlu0
        %v1514 = vpop.trf.xlu0
        %1515 = vxpose.xlu0.b32.start [1/16] %v557, 128
        %1516 = vxpose.xlu0.b32.cont [2/16] %v561, 128
        %1517 = vxpose.xlu0.b32.cont [3/16] %v565, 128
        %1518 = vxpose.xlu0.b32.cont [4/16] %v569, 128
        %1519 = vxpose.xlu0.b32.cont [5/16] %v573, 128
        %1520 = vxpose.xlu0.b32.cont [6/16] %v577, 128
        %1521 = vxpose.xlu0.b32.cont [7/16] %v581, 128
        %1522 = vxpose.xlu0.b32.cont [8/16] %v585, 128
        %1523 = vxpose.xlu0.b32.cont [9/16] %v589, 128
        %1524 = vxpose.xlu0.b32.cont [10/16] %v593, 128
        %1525 = vxpose.xlu0.b32.cont [11/16] %v597, 128
        %1526 = vxpose.xlu0.b32.cont [12/16] %v601, 128
        %1527 = vxpose.xlu0.b32.cont [13/16] %v605, 128
        %1528 = vxpose.xlu0.b32.cont [14/16] %v609, 128
        %1529 = vxpose.xlu0.b32.cont [15/16] %v613, 128
        %1530 = vxpose.xlu0.b32.end [16/16] %v617, 128
        %v1531 = vpop.trf.xlu0
        %v1532 = vpop.trf.xlu0
        %v1533 = vpop.trf.xlu0
        %v1534 = vpop.trf.xlu0
        %v1535 = vpop.trf.xlu0
        %v1536 = vpop.trf.xlu0
        %v1537 = vpop.trf.xlu0
        %v1538 = vpop.trf.xlu0
        %v1539 = vpop.trf.xlu0
        %v1540 = vpop.trf.xlu0
        %v1541 = vpop.trf.xlu0
        %v1542 = vpop.trf.xlu0
        %v1543 = vpop.trf.xlu0
        %v1544 = vpop.trf.xlu0
        %v1545 = vpop.trf.xlu0
        %v1546 = vpop.trf.xlu0
        %1547 = vxpose.xlu0.b32.start [1/16] %v558, 128
        %1548 = vxpose.xlu0.b32.cont [2/16] %v562, 128
        %1549 = vxpose.xlu0.b32.cont [3/16] %v566, 128
        %1550 = vxpose.xlu0.b32.cont [4/16] %v570, 128
        %1551 = vxpose.xlu0.b32.cont [5/16] %v574, 128
        %1552 = vxpose.xlu0.b32.cont [6/16] %v578, 128
        %1553 = vxpose.xlu0.b32.cont [7/16] %v582, 128
        %1554 = vxpose.xlu0.b32.cont [8/16] %v586, 128
        %1555 = vxpose.xlu0.b32.cont [9/16] %v590, 128
        %1556 = vxpose.xlu0.b32.cont [10/16] %v594, 128
        %1557 = vxpose.xlu0.b32.cont [11/16] %v598, 128
        %1558 = vxpose.xlu0.b32.cont [12/16] %v602, 128
        %1559 = vxpose.xlu0.b32.cont [13/16] %v606, 128
        %1560 = vxpose.xlu0.b32.cont [14/16] %v610, 128
        %1561 = vxpose.xlu0.b32.cont [15/16] %v614, 128
        %1562 = vxpose.xlu0.b32.end [16/16] %v618, 128
        %v1563 = vpop.trf.xlu0
        %v1564 = vpop.trf.xlu0
        %v1565 = vpop.trf.xlu0
        %v1566 = vpop.trf.xlu0
        %v1567 = vpop.trf.xlu0
        %v1568 = vpop.trf.xlu0
        %v1569 = vpop.trf.xlu0
        %v1570 = vpop.trf.xlu0
        %v1571 = vpop.trf.xlu0
        %v1572 = vpop.trf.xlu0
        %v1573 = vpop.trf.xlu0
        %v1574 = vpop.trf.xlu0
        %v1575 = vpop.trf.xlu0
        %v1576 = vpop.trf.xlu0
        %v1577 = vpop.trf.xlu0
        %v1578 = vpop.trf.xlu0
        %1579 = vxpose.xlu0.b32.start [1/16] %v619, 128
        %1580 = vxpose.xlu0.b32.cont [2/16] %v623, 128
        %1581 = vxpose.xlu0.b32.cont [3/16] %v627, 128
        %1582 = vxpose.xlu0.b32.cont [4/16] %v631, 128
        %1583 = vxpose.xlu0.b32.cont [5/16] %v635, 128
        %1584 = vxpose.xlu0.b32.cont [6/16] %v639, 128
        %1585 = vxpose.xlu0.b32.cont [7/16] %v643, 128
        %1586 = vxpose.xlu0.b32.cont [8/16] %v647, 128
        %1587 = vxpose.xlu0.b32.cont [9/16] %v651, 128
        %1588 = vxpose.xlu0.b32.cont [10/16] %v655, 128
        %1589 = vxpose.xlu0.b32.cont [11/16] %v659, 128
        %1590 = vxpose.xlu0.b32.cont [12/16] %v663, 128
        %1591 = vxpose.xlu0.b32.cont [13/16] %v667, 128
        %1592 = vxpose.xlu0.b32.cont [14/16] %v671, 128
        %1593 = vxpose.xlu0.b32.cont [15/16] %v675, 128
        %1594 = vxpose.xlu0.b32.end [16/16] %v679, 128
        %v1595 = vpop.trf.xlu0
        %v1596 = vpop.trf.xlu0
        %v1597 = vpop.trf.xlu0
        %v1598 = vpop.trf.xlu0
        %v1599 = vpop.trf.xlu0
        %v1600 = vpop.trf.xlu0
        %v1601 = vpop.trf.xlu0
        %v1602 = vpop.trf.xlu0
        %v1603 = vpop.trf.xlu0
        %v1604 = vpop.trf.xlu0
        %v1605 = vpop.trf.xlu0
        %v1606 = vpop.trf.xlu0
        %v1607 = vpop.trf.xlu0
        %v1608 = vpop.trf.xlu0
        %v1609 = vpop.trf.xlu0
        %v1610 = vpop.trf.xlu0
        %1611 = vxpose.xlu0.b32.start [1/16] %v620, 128
        %1612 = vxpose.xlu0.b32.cont [2/16] %v624, 128
        %1613 = vxpose.xlu0.b32.cont [3/16] %v628, 128
        %1614 = vxpose.xlu0.b32.cont [4/16] %v632, 128
        %1615 = vxpose.xlu0.b32.cont [5/16] %v636, 128
        %1616 = vxpose.xlu0.b32.cont [6/16] %v640, 128
        %1617 = vxpose.xlu0.b32.cont [7/16] %v644, 128
        %1618 = vxpose.xlu0.b32.cont [8/16] %v648, 128
        %1619 = vxpose.xlu0.b32.cont [9/16] %v652, 128
        %1620 = vxpose.xlu0.b32.cont [10/16] %v656, 128
        %1621 = vxpose.xlu0.b32.cont [11/16] %v660, 128
        %1622 = vxpose.xlu0.b32.cont [12/16] %v664, 128
        %1623 = vxpose.xlu0.b32.cont [13/16] %v668, 128
        %1624 = vxpose.xlu0.b32.cont [14/16] %v672, 128
        %1625 = vxpose.xlu0.b32.cont [15/16] %v676, 128
        %1626 = vxpose.xlu0.b32.end [16/16] %v680, 128
        %v1627 = vpop.trf.xlu0
        %v1628 = vpop.trf.xlu0
        %v1629 = vpop.trf.xlu0
        %v1630 = vpop.trf.xlu0
        %v1631 = vpop.trf.xlu0
        %v1632 = vpop.trf.xlu0
        %v1633 = vpop.trf.xlu0
        %v1634 = vpop.trf.xlu0
        %v1635 = vpop.trf.xlu0
        %v1636 = vpop.trf.xlu0
        %v1637 = vpop.trf.xlu0
        %v1638 = vpop.trf.xlu0
        %v1639 = vpop.trf.xlu0
        %v1640 = vpop.trf.xlu0
        %v1641 = vpop.trf.xlu0
        %v1642 = vpop.trf.xlu0
        %1643 = vxpose.xlu0.b32.start [1/16] %v621, 128
        %1644 = vxpose.xlu0.b32.cont [2/16] %v625, 128
        %1645 = vxpose.xlu0.b32.cont [3/16] %v629, 128
        %1646 = vxpose.xlu0.b32.cont [4/16] %v633, 128
        %1647 = vxpose.xlu0.b32.cont [5/16] %v637, 128
        %1648 = vxpose.xlu0.b32.cont [6/16] %v641, 128
        %1649 = vxpose.xlu0.b32.cont [7/16] %v645, 128
        %1650 = vxpose.xlu0.b32.cont [8/16] %v649, 128
        %1651 = vxpose.xlu0.b32.cont [9/16] %v653, 128
        %1652 = vxpose.xlu0.b32.cont [10/16] %v657, 128
        %1653 = vxpose.xlu0.b32.cont [11/16] %v661, 128
        %1654 = vxpose.xlu0.b32.cont [12/16] %v665, 128
        %1655 = vxpose.xlu0.b32.cont [13/16] %v669, 128
        %1656 = vxpose.xlu0.b32.cont [14/16] %v673, 128
        %1657 = vxpose.xlu0.b32.cont [15/16] %v677, 128
        %1658 = vxpose.xlu0.b32.end [16/16] %v681, 128
        %v1659 = vpop.trf.xlu0
        %v1660 = vpop.trf.xlu0
        %v1661 = vpop.trf.xlu0
        %v1662 = vpop.trf.xlu0
        %v1663 = vpop.trf.xlu0
        %v1664 = vpop.trf.xlu0
        %v1665 = vpop.trf.xlu0
        %v1666 = vpop.trf.xlu0
        %v1667 = vpop.trf.xlu0
        %v1668 = vpop.trf.xlu0
        %v1669 = vpop.trf.xlu0
        %v1670 = vpop.trf.xlu0
        %v1671 = vpop.trf.xlu0
        %v1672 = vpop.trf.xlu0
        %v1673 = vpop.trf.xlu0
        %v1674 = vpop.trf.xlu0
        %1675 = vxpose.xlu0.b32.start [1/16] %v622, 128
        %1676 = vxpose.xlu0.b32.cont [2/16] %v626, 128
        %1677 = vxpose.xlu0.b32.cont [3/16] %v630, 128
        %1678 = vxpose.xlu0.b32.cont [4/16] %v634, 128
        %1679 = vxpose.xlu0.b32.cont [5/16] %v638, 128
        %1680 = vxpose.xlu0.b32.cont [6/16] %v642, 128
        %1681 = vxpose.xlu0.b32.cont [7/16] %v646, 128
        %1682 = vxpose.xlu0.b32.cont [8/16] %v650, 128
        %1683 = vxpose.xlu0.b32.cont [9/16] %v654, 128
        %1684 = vxpose.xlu0.b32.cont [10/16] %v658, 128
        %1685 = vxpose.xlu0.b32.cont [11/16] %v662, 128
        %1686 = vxpose.xlu0.b32.cont [12/16] %v666, 128
        %1687 = vxpose.xlu0.b32.cont [13/16] %v670, 128
        %1688 = vxpose.xlu0.b32.cont [14/16] %v674, 128
        %1689 = vxpose.xlu0.b32.cont [15/16] %v678, 128
        %1690 = vxpose.xlu0.b32.end [16/16] %v682, 128
        %v1691 = vpop.trf.xlu0
        %v1692 = vpop.trf.xlu0
        %v1693 = vpop.trf.xlu0
        %v1694 = vpop.trf.xlu0
        %v1695 = vpop.trf.xlu0
        %v1696 = vpop.trf.xlu0
        %v1697 = vpop.trf.xlu0
        %v1698 = vpop.trf.xlu0
        %v1699 = vpop.trf.xlu0
        %v1700 = vpop.trf.xlu0
        %v1701 = vpop.trf.xlu0
        %v1702 = vpop.trf.xlu0
        %v1703 = vpop.trf.xlu0
        %v1704 = vpop.trf.xlu0
        %v1705 = vpop.trf.xlu0
        %v1706 = vpop.trf.xlu0
        %1707 = vst [vmem:[%s166] sm:$0xff] %v699
        %1708 = vst [vmem:[%s166 + $0x8] sm:$0xff] %v827
        %1709 = vst [vmem:[%s166 + $0x10] sm:$0xff] %v955
        %1710 = vst [vmem:[%s166 + $0x18] sm:$0xff] %v1083
        %1711 = vst [vmem:[%s166 + $0x20] sm:$0xff] %v1211
        %1712 = vst [vmem:[%s166 + $0x28] sm:$0xff] %v1339
        %1713 = vst [vmem:[%s166 + $0x30] sm:$0xff] %v1467
        %1714 = vst [vmem:[%s166 + $0x38] sm:$0xff] %v1595
        %1715 = vst [vmem:[%s166 + $0x40] sm:$0xff] %v700
        %1716 = vst [vmem:[%s166 + $0x48] sm:$0xff] %v828
        %1717 = vst [vmem:[%s166 + $0x50] sm:$0xff] %v956
        %1718 = vst [vmem:[%s166 + $0x58] sm:$0xff] %v1084
        %1719 = vst [vmem:[%s166 + $0x60] sm:$0xff] %v1212
        %1720 = vst [vmem:[%s166 + $0x68] sm:$0xff] %v1340
        %1721 = vst [vmem:[%s166 + $0x70] sm:$0xff] %v1468
        %1722 = vst [vmem:[%s166 + $0x78] sm:$0xff] %v1596
        %1723 = vst [vmem:[%s166 + $0x80] sm:$0xff] %v701
        %1724 = vst [vmem:[%s166 + $0x88] sm:$0xff] %v829
        %1725 = vst [vmem:[%s166 + $0x90] sm:$0xff] %v957
        %1726 = vst [vmem:[%s166 + $0x98] sm:$0xff] %v1085
        %1727 = vst [vmem:[%s166 + $0xa0] sm:$0xff] %v1213
        %1728 = vst [vmem:[%s166 + $0xa8] sm:$0xff] %v1341
        %1729 = vst [vmem:[%s166 + $0xb0] sm:$0xff] %v1469
        %1730 = vst [vmem:[%s166 + $0xb8] sm:$0xff] %v1597
        %1731 = vst [vmem:[%s166 + $0xc0] sm:$0xff] %v702
        %1732 = vst [vmem:[%s166 + $0xc8] sm:$0xff] %v830
        %1733 = vst [vmem:[%s166 + $0xd0] sm:$0xff] %v958
        %1734 = vst [vmem:[%s166 + $0xd8] sm:$0xff] %v1086
        %1735 = vst [vmem:[%s166 + $0xe0] sm:$0xff] %v1214
        %1736 = vst [vmem:[%s166 + $0xe8] sm:$0xff] %v1342
        %1737 = vst [vmem:[%s166 + $0xf0] sm:$0xff] %v1470
        %1738 = vst [vmem:[%s166 + $0xf8] sm:$0xff] %v1598
        %1739 = vst [vmem:[%s166 + $0x100] sm:$0xff] %v703
        %1740 = vst [vmem:[%s166 + $0x108] sm:$0xff] %v831
        %1741 = vst [vmem:[%s166 + $0x110] sm:$0xff] %v959
        %1742 = vst [vmem:[%s166 + $0x118] sm:$0xff] %v1087
        %1743 = vst [vmem:[%s166 + $0x120] sm:$0xff] %v1215
        %1744 = vst [vmem:[%s166 + $0x128] sm:$0xff] %v1343
        %1745 = vst [vmem:[%s166 + $0x130] sm:$0xff] %v1471
        %1746 = vst [vmem:[%s166 + $0x138] sm:$0xff] %v1599
        %1747 = vst [vmem:[%s166 + $0x140] sm:$0xff] %v704
        %1748 = vst [vmem:[%s166 + $0x148] sm:$0xff] %v832
        %1749 = vst [vmem:[%s166 + $0x150] sm:$0xff] %v960
        %1750 = vst [vmem:[%s166 + $0x158] sm:$0xff] %v1088
        %1751 = vst [vmem:[%s166 + $0x160] sm:$0xff] %v1216
        %1752 = vst [vmem:[%s166 + $0x168] sm:$0xff] %v1344
        %1753 = vst [vmem:[%s166 + $0x170] sm:$0xff] %v1472
        %1754 = vst [vmem:[%s166 + $0x178] sm:$0xff] %v1600
        %1755 = vst [vmem:[%s166 + $0x180] sm:$0xff] %v705
        %1756 = vst [vmem:[%s166 + $0x188] sm:$0xff] %v833
        %1757 = vst [vmem:[%s166 + $0x190] sm:$0xff] %v961
        %1758 = vst [vmem:[%s166 + $0x198] sm:$0xff] %v1089
        %1759 = vst [vmem:[%s166 + $0x1a0] sm:$0xff] %v1217
        %1760 = vst [vmem:[%s166 + $0x1a8] sm:$0xff] %v1345
        %1761 = vst [vmem:[%s166 + $0x1b0] sm:$0xff] %v1473
        %1762 = vst [vmem:[%s166 + $0x1b8] sm:$0xff] %v1601
        %1763 = vst [vmem:[%s166 + $0x1c0] sm:$0xff] %v706
        %1764 = vst [vmem:[%s166 + $0x1c8] sm:$0xff] %v834
        %1765 = vst [vmem:[%s166 + $0x1d0] sm:$0xff] %v962
        %1766 = vst [vmem:[%s166 + $0x1d8] sm:$0xff] %v1090
        %1767 = vst [vmem:[%s166 + $0x1e0] sm:$0xff] %v1218
        %1768 = vst [vmem:[%s166 + $0x1e8] sm:$0xff] %v1346
        %1769 = vst [vmem:[%s166 + $0x1f0] sm:$0xff] %v1474
        %1770 = vst [vmem:[%s166 + $0x1f8] sm:$0xff] %v1602
        %1771 = vst [vmem:[%s166 + $0x200] sm:$0xff] %v707
        %1772 = vst [vmem:[%s166 + $0x208] sm:$0xff] %v835
        %1773 = vst [vmem:[%s166 + $0x210] sm:$0xff] %v963
        %1774 = vst [vmem:[%s166 + $0x218] sm:$0xff] %v1091
        %1775 = vst [vmem:[%s166 + $0x220] sm:$0xff] %v1219
        %1776 = vst [vmem:[%s166 + $0x228] sm:$0xff] %v1347
        %1777 = vst [vmem:[%s166 + $0x230] sm:$0xff] %v1475
        %1778 = vst [vmem:[%s166 + $0x238] sm:$0xff] %v1603
        %1779 = vst [vmem:[%s166 + $0x240] sm:$0xff] %v708
        %1780 = vst [vmem:[%s166 + $0x248] sm:$0xff] %v836
        %1781 = vst [vmem:[%s166 + $0x250] sm:$0xff] %v964
        %1782 = vst [vmem:[%s166 + $0x258] sm:$0xff] %v1092
        %1783 = vst [vmem:[%s166 + $0x260] sm:$0xff] %v1220
        %1784 = vst [vmem:[%s166 + $0x268] sm:$0xff] %v1348
        %1785 = vst [vmem:[%s166 + $0x270] sm:$0xff] %v1476
        %1786 = vst [vmem:[%s166 + $0x278] sm:$0xff] %v1604
        %1787 = vst [vmem:[%s166 + $0x280] sm:$0xff] %v709
        %1788 = vst [vmem:[%s166 + $0x288] sm:$0xff] %v837
        %1789 = vst [vmem:[%s166 + $0x290] sm:$0xff] %v965
        %1790 = vst [vmem:[%s166 + $0x298] sm:$0xff] %v1093
        %1791 = vst [vmem:[%s166 + $0x2a0] sm:$0xff] %v1221
        %1792 = vst [vmem:[%s166 + $0x2a8] sm:$0xff] %v1349
        %1793 = vst [vmem:[%s166 + $0x2b0] sm:$0xff] %v1477
        %1794 = vst [vmem:[%s166 + $0x2b8] sm:$0xff] %v1605
        %1795 = vst [vmem:[%s166 + $0x2c0] sm:$0xff] %v710
        %1796 = vst [vmem:[%s166 + $0x2c8] sm:$0xff] %v838
        %1797 = vst [vmem:[%s166 + $0x2d0] sm:$0xff] %v966
        %1798 = vst [vmem:[%s166 + $0x2d8] sm:$0xff] %v1094
        %1799 = vst [vmem:[%s166 + $0x2e0] sm:$0xff] %v1222
        %1800 = vst [vmem:[%s166 + $0x2e8] sm:$0xff] %v1350
        %1801 = vst [vmem:[%s166 + $0x2f0] sm:$0xff] %v1478
        %1802 = vst [vmem:[%s166 + $0x2f8] sm:$0xff] %v1606
        %1803 = vst [vmem:[%s166 + $0x300] sm:$0xff] %v711
        %1804 = vst [vmem:[%s166 + $0x308] sm:$0xff] %v839
        %1805 = vst [vmem:[%s166 + $0x310] sm:$0xff] %v967
        %1806 = vst [vmem:[%s166 + $0x318] sm:$0xff] %v1095
        %1807 = vst [vmem:[%s166 + $0x320] sm:$0xff] %v1223
        %1808 = vst [vmem:[%s166 + $0x328] sm:$0xff] %v1351
        %1809 = vst [vmem:[%s166 + $0x330] sm:$0xff] %v1479
        %1810 = vst [vmem:[%s166 + $0x338] sm:$0xff] %v1607
        %1811 = vst [vmem:[%s166 + $0x340] sm:$0xff] %v712
        %1812 = vst [vmem:[%s166 + $0x348] sm:$0xff] %v840
        %1813 = vst [vmem:[%s166 + $0x350] sm:$0xff] %v968
        %1814 = vst [vmem:[%s166 + $0x358] sm:$0xff] %v1096
        %1815 = vst [vmem:[%s166 + $0x360] sm:$0xff] %v1224
        %1816 = vst [vmem:[%s166 + $0x368] sm:$0xff] %v1352
        %1817 = vst [vmem:[%s166 + $0x370] sm:$0xff] %v1480
        %1818 = vst [vmem:[%s166 + $0x378] sm:$0xff] %v1608
        %1819 = vst [vmem:[%s166 + $0x380] sm:$0xff] %v713
        %1820 = vst [vmem:[%s166 + $0x388] sm:$0xff] %v841
        %1821 = vst [vmem:[%s166 + $0x390] sm:$0xff] %v969
        %1822 = vst [vmem:[%s166 + $0x398] sm:$0xff] %v1097
        %1823 = vst [vmem:[%s166 + $0x3a0] sm:$0xff] %v1225
        %1824 = vst [vmem:[%s166 + $0x3a8] sm:$0xff] %v1353
        %1825 = vst [vmem:[%s166 + $0x3b0] sm:$0xff] %v1481
        %1826 = vst [vmem:[%s166 + $0x3b8] sm:$0xff] %v1609
        %1827 = vst [vmem:[%s166 + $0x3c0] sm:$0xff] %v714
        %1828 = vst [vmem:[%s166 + $0x3c8] sm:$0xff] %v842
        %1829 = vst [vmem:[%s166 + $0x3d0] sm:$0xff] %v970
        %1830 = vst [vmem:[%s166 + $0x3d8] sm:$0xff] %v1098
        %1831 = vst [vmem:[%s166 + $0x3e0] sm:$0xff] %v1226
        %1832 = vst [vmem:[%s166 + $0x3e8] sm:$0xff] %v1354
        %1833 = vst [vmem:[%s166 + $0x3f0] sm:$0xff] %v1482
        %1834 = vst [vmem:[%s166 + $0x3f8] sm:$0xff] %v1610
        %1835 = vst [vmem:[%s166 + $0x400] sm:$0xff] %v731
        %1836 = vst [vmem:[%s166 + $0x408] sm:$0xff] %v859
        %1837 = vst [vmem:[%s166 + $0x410] sm:$0xff] %v987
        %1838 = vst [vmem:[%s166 + $0x418] sm:$0xff] %v1115
        %1839 = vst [vmem:[%s166 + $0x420] sm:$0xff] %v1243
        %1840 = vst [vmem:[%s166 + $0x428] sm:$0xff] %v1371
        %1841 = vst [vmem:[%s166 + $0x430] sm:$0xff] %v1499
        %1842 = vst [vmem:[%s166 + $0x438] sm:$0xff] %v1627
        %1843 = vst [vmem:[%s166 + $0x440] sm:$0xff] %v732
        %1844 = vst [vmem:[%s166 + $0x448] sm:$0xff] %v860
        %1845 = vst [vmem:[%s166 + $0x450] sm:$0xff] %v988
        %1846 = vst [vmem:[%s166 + $0x458] sm:$0xff] %v1116
        %1847 = vst [vmem:[%s166 + $0x460] sm:$0xff] %v1244
        %1848 = vst [vmem:[%s166 + $0x468] sm:$0xff] %v1372
        %1849 = vst [vmem:[%s166 + $0x470] sm:$0xff] %v1500
        %1850 = vst [vmem:[%s166 + $0x478] sm:$0xff] %v1628
        %1851 = vst [vmem:[%s166 + $0x480] sm:$0xff] %v733
        %1852 = vst [vmem:[%s166 + $0x488] sm:$0xff] %v861
        %1853 = vst [vmem:[%s166 + $0x490] sm:$0xff] %v989
        %1854 = vst [vmem:[%s166 + $0x498] sm:$0xff] %v1117
        %1855 = vst [vmem:[%s166 + $0x4a0] sm:$0xff] %v1245
        %1856 = vst [vmem:[%s166 + $0x4a8] sm:$0xff] %v1373
        %1857 = vst [vmem:[%s166 + $0x4b0] sm:$0xff] %v1501
        %1858 = vst [vmem:[%s166 + $0x4b8] sm:$0xff] %v1629
        %1859 = vst [vmem:[%s166 + $0x4c0] sm:$0xff] %v734
        %1860 = vst [vmem:[%s166 + $0x4c8] sm:$0xff] %v862
        %1861 = vst [vmem:[%s166 + $0x4d0] sm:$0xff] %v990
        %1862 = vst [vmem:[%s166 + $0x4d8] sm:$0xff] %v1118
        %1863 = vst [vmem:[%s166 + $0x4e0] sm:$0xff] %v1246
        %1864 = vst [vmem:[%s166 + $0x4e8] sm:$0xff] %v1374
        %1865 = vst [vmem:[%s166 + $0x4f0] sm:$0xff] %v1502
        %1866 = vst [vmem:[%s166 + $0x4f8] sm:$0xff] %v1630
        %1867 = vst [vmem:[%s166 + $0x500] sm:$0xff] %v735
        %1868 = vst [vmem:[%s166 + $0x508] sm:$0xff] %v863
        %1869 = vst [vmem:[%s166 + $0x510] sm:$0xff] %v991
        %1870 = vst [vmem:[%s166 + $0x518] sm:$0xff] %v1119
        %1871 = vst [vmem:[%s166 + $0x520] sm:$0xff] %v1247
        %1872 = vst [vmem:[%s166 + $0x528] sm:$0xff] %v1375
        %1873 = vst [vmem:[%s166 + $0x530] sm:$0xff] %v1503
        %1874 = vst [vmem:[%s166 + $0x538] sm:$0xff] %v1631
        %1875 = vst [vmem:[%s166 + $0x540] sm:$0xff] %v736
        %1876 = vst [vmem:[%s166 + $0x548] sm:$0xff] %v864
        %1877 = vst [vmem:[%s166 + $0x550] sm:$0xff] %v992
        %1878 = vst [vmem:[%s166 + $0x558] sm:$0xff] %v1120
        %1879 = vst [vmem:[%s166 + $0x560] sm:$0xff] %v1248
        %1880 = vst [vmem:[%s166 + $0x568] sm:$0xff] %v1376
        %1881 = vst [vmem:[%s166 + $0x570] sm:$0xff] %v1504
        %1882 = vst [vmem:[%s166 + $0x578] sm:$0xff] %v1632
        %1883 = vst [vmem:[%s166 + $0x580] sm:$0xff] %v737
        %1884 = vst [vmem:[%s166 + $0x588] sm:$0xff] %v865
        %1885 = vst [vmem:[%s166 + $0x590] sm:$0xff] %v993
        %1886 = vst [vmem:[%s166 + $0x598] sm:$0xff] %v1121
        %1887 = vst [vmem:[%s166 + $0x5a0] sm:$0xff] %v1249
        %1888 = vst [vmem:[%s166 + $0x5a8] sm:$0xff] %v1377
        %1889 = vst [vmem:[%s166 + $0x5b0] sm:$0xff] %v1505
        %1890 = vst [vmem:[%s166 + $0x5b8] sm:$0xff] %v1633
        %1891 = vst [vmem:[%s166 + $0x5c0] sm:$0xff] %v738
        %1892 = vst [vmem:[%s166 + $0x5c8] sm:$0xff] %v866
        %1893 = vst [vmem:[%s166 + $0x5d0] sm:$0xff] %v994
        %1894 = vst [vmem:[%s166 + $0x5d8] sm:$0xff] %v1122
        %1895 = vst [vmem:[%s166 + $0x5e0] sm:$0xff] %v1250
        %1896 = vst [vmem:[%s166 + $0x5e8] sm:$0xff] %v1378
        %1897 = vst [vmem:[%s166 + $0x5f0] sm:$0xff] %v1506
        %1898 = vst [vmem:[%s166 + $0x5f8] sm:$0xff] %v1634
        %1899 = vst [vmem:[%s166 + $0x600] sm:$0xff] %v739
        %1900 = vst [vmem:[%s166 + $0x608] sm:$0xff] %v867
        %1901 = vst [vmem:[%s166 + $0x610] sm:$0xff] %v995
        %1902 = vst [vmem:[%s166 + $0x618] sm:$0xff] %v1123
        %1903 = vst [vmem:[%s166 + $0x620] sm:$0xff] %v1251
        %1904 = vst [vmem:[%s166 + $0x628] sm:$0xff] %v1379
        %1905 = vst [vmem:[%s166 + $0x630] sm:$0xff] %v1507
        %1906 = vst [vmem:[%s166 + $0x638] sm:$0xff] %v1635
        %1907 = vst [vmem:[%s166 + $0x640] sm:$0xff] %v740
        %1908 = vst [vmem:[%s166 + $0x648] sm:$0xff] %v868
        %1909 = vst [vmem:[%s166 + $0x650] sm:$0xff] %v996
        %1910 = vst [vmem:[%s166 + $0x658] sm:$0xff] %v1124
        %1911 = vst [vmem:[%s166 + $0x660] sm:$0xff] %v1252
        %1912 = vst [vmem:[%s166 + $0x668] sm:$0xff] %v1380
        %1913 = vst [vmem:[%s166 + $0x670] sm:$0xff] %v1508
        %1914 = vst [vmem:[%s166 + $0x678] sm:$0xff] %v1636
        %1915 = vst [vmem:[%s166 + $0x680] sm:$0xff] %v741
        %1916 = vst [vmem:[%s166 + $0x688] sm:$0xff] %v869
        %1917 = vst [vmem:[%s166 + $0x690] sm:$0xff] %v997
        %1918 = vst [vmem:[%s166 + $0x698] sm:$0xff] %v1125
        %1919 = vst [vmem:[%s166 + $0x6a0] sm:$0xff] %v1253
        %1920 = vst [vmem:[%s166 + $0x6a8] sm:$0xff] %v1381
        %1921 = vst [vmem:[%s166 + $0x6b0] sm:$0xff] %v1509
        %1922 = vst [vmem:[%s166 + $0x6b8] sm:$0xff] %v1637
        %1923 = vst [vmem:[%s166 + $0x6c0] sm:$0xff] %v742
        %1924 = vst [vmem:[%s166 + $0x6c8] sm:$0xff] %v870
        %1925 = vst [vmem:[%s166 + $0x6d0] sm:$0xff] %v998
        %1926 = vst [vmem:[%s166 + $0x6d8] sm:$0xff] %v1126
        %1927 = vst [vmem:[%s166 + $0x6e0] sm:$0xff] %v1254
        %1928 = vst [vmem:[%s166 + $0x6e8] sm:$0xff] %v1382
        %1929 = vst [vmem:[%s166 + $0x6f0] sm:$0xff] %v1510
        %1930 = vst [vmem:[%s166 + $0x6f8] sm:$0xff] %v1638
        %1931 = vst [vmem:[%s166 + $0x700] sm:$0xff] %v743
        %1932 = vst [vmem:[%s166 + $0x708] sm:$0xff] %v871
        %1933 = vst [vmem:[%s166 + $0x710] sm:$0xff] %v999
        %1934 = vst [vmem:[%s166 + $0x718] sm:$0xff] %v1127
        %1935 = vst [vmem:[%s166 + $0x720] sm:$0xff] %v1255
        %1936 = vst [vmem:[%s166 + $0x728] sm:$0xff] %v1383
        %1937 = vst [vmem:[%s166 + $0x730] sm:$0xff] %v1511
        %1938 = vst [vmem:[%s166 + $0x738] sm:$0xff] %v1639
        %1939 = vst [vmem:[%s166 + $0x740] sm:$0xff] %v744
        %1940 = vst [vmem:[%s166 + $0x748] sm:$0xff] %v872
        %1941 = vst [vmem:[%s166 + $0x750] sm:$0xff] %v1000
        %1942 = vst [vmem:[%s166 + $0x758] sm:$0xff] %v1128
        %1943 = vst [vmem:[%s166 + $0x760] sm:$0xff] %v1256
        %1944 = vst [vmem:[%s166 + $0x768] sm:$0xff] %v1384
        %1945 = vst [vmem:[%s166 + $0x770] sm:$0xff] %v1512
        %1946 = vst [vmem:[%s166 + $0x778] sm:$0xff] %v1640
        %1947 = vst [vmem:[%s166 + $0x780] sm:$0xff] %v745
        %1948 = vst [vmem:[%s166 + $0x788] sm:$0xff] %v873
        %1949 = vst [vmem:[%s166 + $0x790] sm:$0xff] %v1001
        %1950 = vst [vmem:[%s166 + $0x798] sm:$0xff] %v1129
        %1951 = vst [vmem:[%s166 + $0x7a0] sm:$0xff] %v1257
        %1952 = vst [vmem:[%s166 + $0x7a8] sm:$0xff] %v1385
        %1953 = vst [vmem:[%s166 + $0x7b0] sm:$0xff] %v1513
        %1954 = vst [vmem:[%s166 + $0x7b8] sm:$0xff] %v1641
        %1955 = vst [vmem:[%s166 + $0x7c0] sm:$0xff] %v746
        %1956 = vst [vmem:[%s166 + $0x7c8] sm:$0xff] %v874
        %1957 = vst [vmem:[%s166 + $0x7d0] sm:$0xff] %v1002
        %1958 = vst [vmem:[%s166 + $0x7d8] sm:$0xff] %v1130
        %1959 = vst [vmem:[%s166 + $0x7e0] sm:$0xff] %v1258
        %1960 = vst [vmem:[%s166 + $0x7e8] sm:$0xff] %v1386
        %1961 = vst [vmem:[%s166 + $0x7f0] sm:$0xff] %v1514
        %1962 = vst [vmem:[%s166 + $0x7f8] sm:$0xff] %v1642
        %1963 = vst [vmem:[%s166 + $0x800] sm:$0xff] %v763
        %1964 = vst [vmem:[%s166 + $0x808] sm:$0xff] %v891
        %1965 = vst [vmem:[%s166 + $0x810] sm:$0xff] %v1019
        %1966 = vst [vmem:[%s166 + $0x818] sm:$0xff] %v1147
        %1967 = vst [vmem:[%s166 + $0x820] sm:$0xff] %v1275
        %1968 = vst [vmem:[%s166 + $0x828] sm:$0xff] %v1403
        %1969 = vst [vmem:[%s166 + $0x830] sm:$0xff] %v1531
        %1970 = vst [vmem:[%s166 + $0x838] sm:$0xff] %v1659
        %1971 = vst [vmem:[%s166 + $0x840] sm:$0xff] %v764
        %1972 = vst [vmem:[%s166 + $0x848] sm:$0xff] %v892
        %1973 = vst [vmem:[%s166 + $0x850] sm:$0xff] %v1020
        %1974 = vst [vmem:[%s166 + $0x858] sm:$0xff] %v1148
        %1975 = vst [vmem:[%s166 + $0x860] sm:$0xff] %v1276
        %1976 = vst [vmem:[%s166 + $0x868] sm:$0xff] %v1404
        %1977 = vst [vmem:[%s166 + $0x870] sm:$0xff] %v1532
        %1978 = vst [vmem:[%s166 + $0x878] sm:$0xff] %v1660
        %1979 = vst [vmem:[%s166 + $0x880] sm:$0xff] %v765
        %1980 = vst [vmem:[%s166 + $0x888] sm:$0xff] %v893
        %1981 = vst [vmem:[%s166 + $0x890] sm:$0xff] %v1021
        %1982 = vst [vmem:[%s166 + $0x898] sm:$0xff] %v1149
        %1983 = vst [vmem:[%s166 + $0x8a0] sm:$0xff] %v1277
        %1984 = vst [vmem:[%s166 + $0x8a8] sm:$0xff] %v1405
        %1985 = vst [vmem:[%s166 + $0x8b0] sm:$0xff] %v1533
        %1986 = vst [vmem:[%s166 + $0x8b8] sm:$0xff] %v1661
        %1987 = vst [vmem:[%s166 + $0x8c0] sm:$0xff] %v766
        %1988 = vst [vmem:[%s166 + $0x8c8] sm:$0xff] %v894
        %1989 = vst [vmem:[%s166 + $0x8d0] sm:$0xff] %v1022
        %1990 = vst [vmem:[%s166 + $0x8d8] sm:$0xff] %v1150
        %1991 = vst [vmem:[%s166 + $0x8e0] sm:$0xff] %v1278
        %1992 = vst [vmem:[%s166 + $0x8e8] sm:$0xff] %v1406
        %1993 = vst [vmem:[%s166 + $0x8f0] sm:$0xff] %v1534
        %1994 = vst [vmem:[%s166 + $0x8f8] sm:$0xff] %v1662
        %1995 = vst [vmem:[%s166 + $0x900] sm:$0xff] %v767
        %1996 = vst [vmem:[%s166 + $0x908] sm:$0xff] %v895
        %1997 = vst [vmem:[%s166 + $0x910] sm:$0xff] %v1023
        %1998 = vst [vmem:[%s166 + $0x918] sm:$0xff] %v1151
        %1999 = vst [vmem:[%s166 + $0x920] sm:$0xff] %v1279
        %2000 = vst [vmem:[%s166 + $0x928] sm:$0xff] %v1407
        %2001 = vst [vmem:[%s166 + $0x930] sm:$0xff] %v1535
        %2002 = vst [vmem:[%s166 + $0x938] sm:$0xff] %v1663
        %2003 = vst [vmem:[%s166 + $0x940] sm:$0xff] %v768
        %2004 = vst [vmem:[%s166 + $0x948] sm:$0xff] %v896
        %2005 = vst [vmem:[%s166 + $0x950] sm:$0xff] %v1024
        %2006 = vst [vmem:[%s166 + $0x958] sm:$0xff] %v1152
        %2007 = vst [vmem:[%s166 + $0x960] sm:$0xff] %v1280
        %2008 = vst [vmem:[%s166 + $0x968] sm:$0xff] %v1408
        %2009 = vst [vmem:[%s166 + $0x970] sm:$0xff] %v1536
        %2010 = vst [vmem:[%s166 + $0x978] sm:$0xff] %v1664
        %2011 = vst [vmem:[%s166 + $0x980] sm:$0xff] %v769
        %2012 = vst [vmem:[%s166 + $0x988] sm:$0xff] %v897
        %2013 = vst [vmem:[%s166 + $0x990] sm:$0xff] %v1025
        %2014 = vst [vmem:[%s166 + $0x998] sm:$0xff] %v1153
        %2015 = vst [vmem:[%s166 + $0x9a0] sm:$0xff] %v1281
        %2016 = vst [vmem:[%s166 + $0x9a8] sm:$0xff] %v1409
        %2017 = vst [vmem:[%s166 + $0x9b0] sm:$0xff] %v1537
        %2018 = vst [vmem:[%s166 + $0x9b8] sm:$0xff] %v1665
        %2019 = vst [vmem:[%s166 + $0x9c0] sm:$0xff] %v770
        %2020 = vst [vmem:[%s166 + $0x9c8] sm:$0xff] %v898
        %2021 = vst [vmem:[%s166 + $0x9d0] sm:$0xff] %v1026
        %2022 = vst [vmem:[%s166 + $0x9d8] sm:$0xff] %v1154
        %2023 = vst [vmem:[%s166 + $0x9e0] sm:$0xff] %v1282
        %2024 = vst [vmem:[%s166 + $0x9e8] sm:$0xff] %v1410
        %2025 = vst [vmem:[%s166 + $0x9f0] sm:$0xff] %v1538
        %2026 = vst [vmem:[%s166 + $0x9f8] sm:$0xff] %v1666
        %2027 = vst [vmem:[%s166 + $0xa00] sm:$0xff] %v771
        %2028 = vst [vmem:[%s166 + $0xa08] sm:$0xff] %v899
        %2029 = vst [vmem:[%s166 + $0xa10] sm:$0xff] %v1027
        %2030 = vst [vmem:[%s166 + $0xa18] sm:$0xff] %v1155
        %2031 = vst [vmem:[%s166 + $0xa20] sm:$0xff] %v1283
        %2032 = vst [vmem:[%s166 + $0xa28] sm:$0xff] %v1411
        %2033 = vst [vmem:[%s166 + $0xa30] sm:$0xff] %v1539
        %2034 = vst [vmem:[%s166 + $0xa38] sm:$0xff] %v1667
        %2035 = vst [vmem:[%s166 + $0xa40] sm:$0xff] %v772
        %2036 = vst [vmem:[%s166 + $0xa48] sm:$0xff] %v900
        %2037 = vst [vmem:[%s166 + $0xa50] sm:$0xff] %v1028
        %2038 = vst [vmem:[%s166 + $0xa58] sm:$0xff] %v1156
        %2039 = vst [vmem:[%s166 + $0xa60] sm:$0xff] %v1284
        %2040 = vst [vmem:[%s166 + $0xa68] sm:$0xff] %v1412
        %2041 = vst [vmem:[%s166 + $0xa70] sm:$0xff] %v1540
        %2042 = vst [vmem:[%s166 + $0xa78] sm:$0xff] %v1668
        %2043 = vst [vmem:[%s166 + $0xa80] sm:$0xff] %v773
        %2044 = vst [vmem:[%s166 + $0xa88] sm:$0xff] %v901
        %2045 = vst [vmem:[%s166 + $0xa90] sm:$0xff] %v1029
        %2046 = vst [vmem:[%s166 + $0xa98] sm:$0xff] %v1157
        %2047 = vst [vmem:[%s166 + $0xaa0] sm:$0xff] %v1285
        %2048 = vst [vmem:[%s166 + $0xaa8] sm:$0xff] %v1413
        %2049 = vst [vmem:[%s166 + $0xab0] sm:$0xff] %v1541
        %2050 = vst [vmem:[%s166 + $0xab8] sm:$0xff] %v1669
        %2051 = vst [vmem:[%s166 + $0xac0] sm:$0xff] %v774
        %2052 = vst [vmem:[%s166 + $0xac8] sm:$0xff] %v902
        %2053 = vst [vmem:[%s166 + $0xad0] sm:$0xff] %v1030
        %2054 = vst [vmem:[%s166 + $0xad8] sm:$0xff] %v1158
        %2055 = vst [vmem:[%s166 + $0xae0] sm:$0xff] %v1286
        %2056 = vst [vmem:[%s166 + $0xae8] sm:$0xff] %v1414
        %2057 = vst [vmem:[%s166 + $0xaf0] sm:$0xff] %v1542
        %2058 = vst [vmem:[%s166 + $0xaf8] sm:$0xff] %v1670
        %2059 = vst [vmem:[%s166 + $0xb00] sm:$0xff] %v775
        %2060 = vst [vmem:[%s166 + $0xb08] sm:$0xff] %v903
        %2061 = vst [vmem:[%s166 + $0xb10] sm:$0xff] %v1031
        %2062 = vst [vmem:[%s166 + $0xb18] sm:$0xff] %v1159
        %2063 = vst [vmem:[%s166 + $0xb20] sm:$0xff] %v1287
        %2064 = vst [vmem:[%s166 + $0xb28] sm:$0xff] %v1415
        %2065 = vst [vmem:[%s166 + $0xb30] sm:$0xff] %v1543
        %2066 = vst [vmem:[%s166 + $0xb38] sm:$0xff] %v1671
        %2067 = vst [vmem:[%s166 + $0xb40] sm:$0xff] %v776
        %2068 = vst [vmem:[%s166 + $0xb48] sm:$0xff] %v904
        %2069 = vst [vmem:[%s166 + $0xb50] sm:$0xff] %v1032
        %2070 = vst [vmem:[%s166 + $0xb58] sm:$0xff] %v1160
        %2071 = vst [vmem:[%s166 + $0xb60] sm:$0xff] %v1288
        %2072 = vst [vmem:[%s166 + $0xb68] sm:$0xff] %v1416
        %2073 = vst [vmem:[%s166 + $0xb70] sm:$0xff] %v1544
        %2074 = vst [vmem:[%s166 + $0xb78] sm:$0xff] %v1672
        %2075 = vst [vmem:[%s166 + $0xb80] sm:$0xff] %v777
        %2076 = vst [vmem:[%s166 + $0xb88] sm:$0xff] %v905
        %2077 = vst [vmem:[%s166 + $0xb90] sm:$0xff] %v1033
        %2078 = vst [vmem:[%s166 + $0xb98] sm:$0xff] %v1161
        %2079 = vst [vmem:[%s166 + $0xba0] sm:$0xff] %v1289
        %2080 = vst [vmem:[%s166 + $0xba8] sm:$0xff] %v1417
        %2081 = vst [vmem:[%s166 + $0xbb0] sm:$0xff] %v1545
        %2082 = vst [vmem:[%s166 + $0xbb8] sm:$0xff] %v1673
        %2083 = vst [vmem:[%s166 + $0xbc0] sm:$0xff] %v778
        %2084 = vst [vmem:[%s166 + $0xbc8] sm:$0xff] %v906
        %2085 = vst [vmem:[%s166 + $0xbd0] sm:$0xff] %v1034
        %2086 = vst [vmem:[%s166 + $0xbd8] sm:$0xff] %v1162
        %2087 = vst [vmem:[%s166 + $0xbe0] sm:$0xff] %v1290
        %2088 = vst [vmem:[%s166 + $0xbe8] sm:$0xff] %v1418
        %2089 = vst [vmem:[%s166 + $0xbf0] sm:$0xff] %v1546
        %2090 = vst [vmem:[%s166 + $0xbf8] sm:$0xff] %v1674
        %2091 = vst [vmem:[%s166 + $0xc00] sm:$0xff] %v795
        %2092 = vst [vmem:[%s166 + $0xc08] sm:$0xff] %v923
        %2093 = vst [vmem:[%s166 + $0xc10] sm:$0xff] %v1051
        %2094 = vst [vmem:[%s166 + $0xc18] sm:$0xff] %v1179
        %2095 = vst [vmem:[%s166 + $0xc20] sm:$0xff] %v1307
        %2096 = vst [vmem:[%s166 + $0xc28] sm:$0xff] %v1435
        %2097 = vst [vmem:[%s166 + $0xc30] sm:$0xff] %v1563
        %2098 = vst [vmem:[%s166 + $0xc38] sm:$0xff] %v1691
        %2099 = vst [vmem:[%s166 + $0xc40] sm:$0xff] %v796
        %2100 = vst [vmem:[%s166 + $0xc48] sm:$0xff] %v924
        %2101 = vst [vmem:[%s166 + $0xc50] sm:$0xff] %v1052
        %2102 = vst [vmem:[%s166 + $0xc58] sm:$0xff] %v1180
        %2103 = vst [vmem:[%s166 + $0xc60] sm:$0xff] %v1308
        %2104 = vst [vmem:[%s166 + $0xc68] sm:$0xff] %v1436
        %2105 = vst [vmem:[%s166 + $0xc70] sm:$0xff] %v1564
        %2106 = vst [vmem:[%s166 + $0xc78] sm:$0xff] %v1692
        %2107 = vst [vmem:[%s166 + $0xc80] sm:$0xff] %v797
        %2108 = vst [vmem:[%s166 + $0xc88] sm:$0xff] %v925
        %2109 = vst [vmem:[%s166 + $0xc90] sm:$0xff] %v1053
        %2110 = vst [vmem:[%s166 + $0xc98] sm:$0xff] %v1181
        %2111 = vst [vmem:[%s166 + $0xca0] sm:$0xff] %v1309
        %2112 = vst [vmem:[%s166 + $0xca8] sm:$0xff] %v1437
        %2113 = vst [vmem:[%s166 + $0xcb0] sm:$0xff] %v1565
        %2114 = vst [vmem:[%s166 + $0xcb8] sm:$0xff] %v1693
        %2115 = vst [vmem:[%s166 + $0xcc0] sm:$0xff] %v798
        %2116 = vst [vmem:[%s166 + $0xcc8] sm:$0xff] %v926
        %2117 = vst [vmem:[%s166 + $0xcd0] sm:$0xff] %v1054
        %2118 = vst [vmem:[%s166 + $0xcd8] sm:$0xff] %v1182
        %2119 = vst [vmem:[%s166 + $0xce0] sm:$0xff] %v1310
        %2120 = vst [vmem:[%s166 + $0xce8] sm:$0xff] %v1438
        %2121 = vst [vmem:[%s166 + $0xcf0] sm:$0xff] %v1566
        %2122 = vst [vmem:[%s166 + $0xcf8] sm:$0xff] %v1694
        %2123 = vst [vmem:[%s166 + $0xd00] sm:$0xff] %v799
        %2124 = vst [vmem:[%s166 + $0xd08] sm:$0xff] %v927
        %2125 = vst [vmem:[%s166 + $0xd10] sm:$0xff] %v1055
        %2126 = vst [vmem:[%s166 + $0xd18] sm:$0xff] %v1183
        %2127 = vst [vmem:[%s166 + $0xd20] sm:$0xff] %v1311
        %2128 = vst [vmem:[%s166 + $0xd28] sm:$0xff] %v1439
        %2129 = vst [vmem:[%s166 + $0xd30] sm:$0xff] %v1567
        %2130 = vst [vmem:[%s166 + $0xd38] sm:$0xff] %v1695
        %2131 = vst [vmem:[%s166 + $0xd40] sm:$0xff] %v800
        %2132 = vst [vmem:[%s166 + $0xd48] sm:$0xff] %v928
        %2133 = vst [vmem:[%s166 + $0xd50] sm:$0xff] %v1056
        %2134 = vst [vmem:[%s166 + $0xd58] sm:$0xff] %v1184
        %2135 = vst [vmem:[%s166 + $0xd60] sm:$0xff] %v1312
        %2136 = vst [vmem:[%s166 + $0xd68] sm:$0xff] %v1440
        %2137 = vst [vmem:[%s166 + $0xd70] sm:$0xff] %v1568
        %2138 = vst [vmem:[%s166 + $0xd78] sm:$0xff] %v1696
        %2139 = vst [vmem:[%s166 + $0xd80] sm:$0xff] %v801
        %2140 = vst [vmem:[%s166 + $0xd88] sm:$0xff] %v929
        %2141 = vst [vmem:[%s166 + $0xd90] sm:$0xff] %v1057
        %2142 = vst [vmem:[%s166 + $0xd98] sm:$0xff] %v1185
        %2143 = vst [vmem:[%s166 + $0xda0] sm:$0xff] %v1313
        %2144 = vst [vmem:[%s166 + $0xda8] sm:$0xff] %v1441
        %2145 = vst [vmem:[%s166 + $0xdb0] sm:$0xff] %v1569
        %2146 = vst [vmem:[%s166 + $0xdb8] sm:$0xff] %v1697
        %2147 = vst [vmem:[%s166 + $0xdc0] sm:$0xff] %v802
        %2148 = vst [vmem:[%s166 + $0xdc8] sm:$0xff] %v930
        %2149 = vst [vmem:[%s166 + $0xdd0] sm:$0xff] %v1058
        %2150 = vst [vmem:[%s166 + $0xdd8] sm:$0xff] %v1186
        %2151 = vst [vmem:[%s166 + $0xde0] sm:$0xff] %v1314
        %2152 = vst [vmem:[%s166 + $0xde8] sm:$0xff] %v1442
        %2153 = vst [vmem:[%s166 + $0xdf0] sm:$0xff] %v1570
        %2154 = vst [vmem:[%s166 + $0xdf8] sm:$0xff] %v1698
        %2155 = vst [vmem:[%s166 + $0xe00] sm:$0xff] %v803
        %2156 = vst [vmem:[%s166 + $0xe08] sm:$0xff] %v931
        %2157 = vst [vmem:[%s166 + $0xe10] sm:$0xff] %v1059
        %2158 = vst [vmem:[%s166 + $0xe18] sm:$0xff] %v1187
        %2159 = vst [vmem:[%s166 + $0xe20] sm:$0xff] %v1315
        %2160 = vst [vmem:[%s166 + $0xe28] sm:$0xff] %v1443
        %2161 = vst [vmem:[%s166 + $0xe30] sm:$0xff] %v1571
        %2162 = vst [vmem:[%s166 + $0xe38] sm:$0xff] %v1699
        %2163 = vst [vmem:[%s166 + $0xe40] sm:$0xff] %v804
        %2164 = vst [vmem:[%s166 + $0xe48] sm:$0xff] %v932
        %2165 = vst [vmem:[%s166 + $0xe50] sm:$0xff] %v1060
        %2166 = vst [vmem:[%s166 + $0xe58] sm:$0xff] %v1188
        %2167 = vst [vmem:[%s166 + $0xe60] sm:$0xff] %v1316
        %2168 = vst [vmem:[%s166 + $0xe68] sm:$0xff] %v1444
        %2169 = vst [vmem:[%s166 + $0xe70] sm:$0xff] %v1572
        %2170 = vst [vmem:[%s166 + $0xe78] sm:$0xff] %v1700
        %2171 = vst [vmem:[%s166 + $0xe80] sm:$0xff] %v805
        %2172 = vst [vmem:[%s166 + $0xe88] sm:$0xff] %v933
        %2173 = vst [vmem:[%s166 + $0xe90] sm:$0xff] %v1061
        %2174 = vst [vmem:[%s166 + $0xe98] sm:$0xff] %v1189
        %2175 = vst [vmem:[%s166 + $0xea0] sm:$0xff] %v1317
        %2176 = vst [vmem:[%s166 + $0xea8] sm:$0xff] %v1445
        %2177 = vst [vmem:[%s166 + $0xeb0] sm:$0xff] %v1573
        %2178 = vst [vmem:[%s166 + $0xeb8] sm:$0xff] %v1701
        %2179 = vst [vmem:[%s166 + $0xec0] sm:$0xff] %v806
        %2180 = vst [vmem:[%s166 + $0xec8] sm:$0xff] %v934
        %2181 = vst [vmem:[%s166 + $0xed0] sm:$0xff] %v1062
        %2182 = vst [vmem:[%s166 + $0xed8] sm:$0xff] %v1190
        %2183 = vst [vmem:[%s166 + $0xee0] sm:$0xff] %v1318
        %2184 = vst [vmem:[%s166 + $0xee8] sm:$0xff] %v1446
        %2185 = vst [vmem:[%s166 + $0xef0] sm:$0xff] %v1574
        %2186 = vst [vmem:[%s166 + $0xef8] sm:$0xff] %v1702
        %2187 = vst [vmem:[%s166 + $0xf00] sm:$0xff] %v807
        %2188 = vst [vmem:[%s166 + $0xf08] sm:$0xff] %v935
        %2189 = vst [vmem:[%s166 + $0xf10] sm:$0xff] %v1063
        %2190 = vst [vmem:[%s166 + $0xf18] sm:$0xff] %v1191
        %2191 = vst [vmem:[%s166 + $0xf20] sm:$0xff] %v1319
        %2192 = vst [vmem:[%s166 + $0xf28] sm:$0xff] %v1447
        %2193 = vst [vmem:[%s166 + $0xf30] sm:$0xff] %v1575
        %2194 = vst [vmem:[%s166 + $0xf38] sm:$0xff] %v1703
        %2195 = vst [vmem:[%s166 + $0xf40] sm:$0xff] %v808
        %2196 = vst [vmem:[%s166 + $0xf48] sm:$0xff] %v936
        %2197 = vst [vmem:[%s166 + $0xf50] sm:$0xff] %v1064
        %2198 = vst [vmem:[%s166 + $0xf58] sm:$0xff] %v1192
        %2199 = vst [vmem:[%s166 + $0xf60] sm:$0xff] %v1320
        %2200 = vst [vmem:[%s166 + $0xf68] sm:$0xff] %v1448
        %2201 = vst [vmem:[%s166 + $0xf70] sm:$0xff] %v1576
        %2202 = vst [vmem:[%s166 + $0xf78] sm:$0xff] %v1704
        %2203 = vst [vmem:[%s166 + $0xf80] sm:$0xff] %v809
        %2204 = vst [vmem:[%s166 + $0xf88] sm:$0xff] %v937
        %2205 = vst [vmem:[%s166 + $0xf90] sm:$0xff] %v1065
        %2206 = vst [vmem:[%s166 + $0xf98] sm:$0xff] %v1193
        %2207 = vst [vmem:[%s166 + $0xfa0] sm:$0xff] %v1321
        %2208 = vst [vmem:[%s166 + $0xfa8] sm:$0xff] %v1449
        %2209 = vst [vmem:[%s166 + $0xfb0] sm:$0xff] %v1577
        %2210 = vst [vmem:[%s166 + $0xfb8] sm:$0xff] %v1705
        %2211 = vst [vmem:[%s166 + $0xfc0] sm:$0xff] %v810
        %2212 = vst [vmem:[%s166 + $0xfc8] sm:$0xff] %v938
        %2213 = vst [vmem:[%s166 + $0xfd0] sm:$0xff] %v1066
        %2214 = vst [vmem:[%s166 + $0xfd8] sm:$0xff] %v1194
        %2215 = vst [vmem:[%s166 + $0xfe0] sm:$0xff] %v1322
        %2216 = vst [vmem:[%s166 + $0xfe8] sm:$0xff] %v1450
        %2217 = vst [vmem:[%s166 + $0xff0] sm:$0xff] %v1578
        %2218 = vst [vmem:[%s166 + $0xff8] sm:$0xff] %v1706
        %s2219 = sand.u32 %s79, 1
        %s2220 = scalar_lea.sflag [#allocation4], %s2219
        %s2221 = sand.u32 %s79, 1
        %s2222 = smul.addr %s2221, 4096
        %s2223 = scalar_lea.vmem [#allocation5], %s2222
        // Predicated region
        $region29: #{tpu_custom_call.1} parent=23 // pred_check
          %p2224 = pneg %p89
        $region30: #{tpu_custom_call.1} parent=23 // pred_check_branch
          %2226 = sbr.rel (%p2224) target = $region32
        $region31: #{tpu_custom_call.1} parent=23 // pred_region
          %s2227 = smul.u32 64, %s24
          %s2228 = smul.u32 8, %s25
          %s2230 = ssub.s32 65536, 65536
          %2231 = vsyncadd %s2220, %s2230
          %s2232 = smul.addr %s2227, 8
          %s2233 = sadd.s32 %s2228, %s2232
          %s2234 = smul.addr %s23, 512
          %s2235 = sadd.s32 %s2233, %s2234
          %s2236 = smul.addr %s2235, 128
          %s2237 = scalar_lea.hbm %s1, %s2236
          %s2238 = sshll.u32 %s2223, 4
          %s2239 = int_to_ptr.vmem [resolvable:$true] %s2238
          %2244 = dma.vmem_to_hbm [thread:$0]  %s2239, 65536, %s2237, %s2220, 1024, 1024, 64
        $region32: #{tpu_custom_call.1} parent=23 // pred_fallthru
          _
      $region24: #{tpu_custom_call.1} parent=5 // pred_fallthru
        _
      %p2245 = scmp.le.s32.totalorder 2, %s13
      // Predicated region
      $region33: #{tpu_custom_call.1} parent=5 // pred_check
        %p2246 = pneg %p2245
      $region34: #{tpu_custom_call.1} parent=5 // pred_check_branch
        %2248 = sbr.rel (%p2246) target = $region36
      $region35: #{tpu_custom_call.1} parent=5 // pred_region
        %s2249 = ssub.s32 %s13, 2
        // Predicated region
        $region37: #{tpu_custom_call.1} parent=35 // pred_check
          %p2250 = pneg %p95
        $region38: #{tpu_custom_call.1} parent=35 // pred_check_branch
          %2252 = sbr.rel (%p2250) target = $region40
        $region39: #{tpu_custom_call.1} parent=35 // pred_region
          %s2253 = sand.u32 %s80, 1
          %s2254 = scalar_lea.sflag [#allocation4], %s2253
          %s2255 = sand.u32 %s80, 1
          %s2256 = smul.addr %s2255, 4096
          %s2257 = scalar_lea.vmem [#allocation5], %s2256
          %2258 = dma.done %s2254, 65536
        $region40: #{tpu_custom_call.1} parent=35 // pred_fallthru
          _
      $region36: #{tpu_custom_call.1} parent=5 // pred_fallthru
        _
    $region6: #{tpu_custom_call.1} parent=1 // loop_footer
      %s17 = sadd.s32 1, %s13
    $region7: #{tpu_custom_call.1} parent=1 // loop_footer_branch
      %12 = sbr.rel target = $region3
    $region8: #{tpu_custom_call.1} parent=1 // loop_exit
      _
    %2259 = vsyncpa [#allocation3], 1
    %s2260 = scalar_lea.sflag [#allocation3], 1
    %2261 = vsyncpa %s2260, 1
    %2262 = vsyncpa [#allocation4], 1
    %s2263 = scalar_lea.sflag [#allocation4], 1
    %2264 = vsyncpa %s2263, 1

</llo_original>
